<compile_context>
chip_gen: v6e
topology: v6e:2x2x1
jax: 0.10.0
libtpu: 0.0.40
codegen_flags: <defaults>
</compile_context>

<pallas_src>
import functools

import jax
import jax.numpy as jnp
import numpy as np
from jax.experimental import pallas as pl
from jax.experimental.pallas import tpu as pltpu

EPS = 1e-5  # BatchNorm eps


def _round_up(x, m):
    return ((x + m - 1) // m) * m


# ----------------------------- Pallas kernels ------------------------------ #

def _conv_stats_kernel(patch_ref, w_ref, sum_ref, sq_ref):
    """Pass 1: patches tile (TM, K) bf16 @ w (K, Cp) bf16 -> accumulate
    per-channel sum and sum-of-squares into a resident (8, Cp) f32 block.

    Grid is (2, n_half): axis 0 ("parallel") selects which independent half of
    the M rows (and which output block) this core owns; axis 1 ("arbitrary")
    is the reduction over that half's row tiles.
    """
    @pl.when(pl.program_id(1) == 0)
    def _init():
        sum_ref[...] = jnp.zeros_like(sum_ref)
        sq_ref[...] = jnp.zeros_like(sq_ref)

    y = jnp.dot(patch_ref[...], w_ref[...], preferred_element_type=jnp.float32)
    y8 = y.reshape(-1, 8, y.shape[-1])           # fold rows onto 8 sublanes
    sum_ref[...] += jnp.sum(y8, axis=0)
    sq_ref[...] += jnp.sum(y8 * y8, axis=0)


def _conv_bn_relu_pool_kernel(patch_ref, w_ref, scale_ref, shift_ref, o_ref,
                              zpad_ref, *, Ho, Wo, Hp, Wp):
    """Pass 2 (one (n, t) frame per grid step):
       conv matmul -> BN affine (scale/shift) -> ReLU -> MaxPool 3x3 stride 2 pad 1.

    patch_ref: (1, Ho*Wo, K) bf16     w_ref: (K, Cp) bf16
    scale/shift: (1, Cp) f32          o_ref: (1, Hp, Wp, Cp) bf16
    zpad_ref:  VMEM (2*Hp+2, Wo+2, Cp) f32 scratch (conv frame + 1-px pool pad)
    """
    Hzp, Wzp, Cp = zpad_ref.shape

    y = jnp.dot(patch_ref[0], w_ref[...], preferred_element_type=jnp.float32)
    z = jnp.maximum(y * scale_ref[...] + shift_ref[...], 0.0)        # BN + ReLU

    # Zero padding is equivalent to PyTorch's -inf maxpool padding here because
    # every value is post-ReLU (>= 0) and each pool window has >= 1 real
    # element.  Only the thin border is zeroed each step (the interior is fully
    # overwritten just below); this must NOT become a pid==0 one-time init: the
    # frame grid axis is "parallel" (megacore-sharded on v7x).
    zpad_ref[0:1, :, :] = jnp.zeros((1, Wzp, Cp), jnp.float32)
    zpad_ref[Ho + 1:Hzp, :, :] = jnp.zeros((Hzp - Ho - 1, Wzp, Cp), jnp.float32)
    zpad_ref[:, 0:1, :] = jnp.zeros((Hzp, 1, Cp), jnp.float32)
    zpad_ref[:, Wo + 1:Wzp, :] = jnp.zeros((Hzp, Wzp - Wo - 1, Cp), jnp.float32)
    zpad_ref[1:Ho + 1, 1:Wo + 1, :] = z.reshape(Ho, Wo, Cp)

    # 3-tap max + stride-2 downsample along W (sublane-strided reads).
    wm = jnp.maximum(
        jnp.maximum(zpad_ref[:, pl.ds(0, Wp, stride=2), :],
                    zpad_ref[:, pl.ds(1, Wp, stride=2), :]),
        zpad_ref[:, pl.ds(2, Wp, stride=2), :])                      # (Hzp, Wp, Cp)

    # 3-tap max + stride-2 along H with NO intermediate scratch / stores:
    # pair rows (2hp, 2hp+1) via a leading-dim reshape, add the (2hp+2) row.
    pair = wm[0:2 * Hp].reshape(Hp, 2, Wp, Cp)
    third = wm[2:2 * Hp + 2].reshape(Hp, 2, Wp, Cp)[:, 0]
    hm = jnp.maximum(jnp.maximum(pair[:, 0], pair[:, 1]), third)     # (Hp, Wp, Cp)
    o_ref[0] = hm.astype(o_ref.dtype)


# ------------------------------- wrapper ----------------------------------- #

@functools.partial(jax.jit,
                   static_argnames=("kernel", "stride", "padding", "eps", "tile_m"))
def resnet_basic_stem(x_ncdhw, weight, gamma, beta, *, kernel, stride, padding,
                      eps=EPS, tile_m=2048):
    """Forward of ResNetBasicStem.

    x_ncdhw: (N, Cin, T, H, W)   weight: (Cout, Cin, kT, kH, kW)
    gamma/beta: (Cout,)          returns (N, Cout, T_out, H_pool, W_pool) f32
    """
    kT, kH, kW = kernel
    sT, sH, sW = stride
    pT, pH, pW = padding
    N, Cin, T, H, W = x_ncdhw.shape
    Cout = weight.shape[0]
    Cp = _round_up(Cout, 128)                    # lane-dense channel padding

    x = jnp.transpose(x_ncdhw, (0, 2, 3, 4, 1)).astype(jnp.float32)  # (N,T,H,W,Cin)
    xp = jnp.pad(x, ((0, 0), (pT, pT), (pH, pH), (pW, pW), (0, 0)))
    To = (T + 2 * pT - kT) // sT + 1
    Ho = (H + 2 * pH - kH) // sH + 1
    Wo = (W + 2 * pW - kW) // sW + 1

    # ---- im2col (wrapper-side layout glue), carried in bf16 ----
    # NOTE(perf): an in-kernel im2col from a halo'd raw frame was evaluated and
    # deliberately NOT adopted for this stem shape: with Cin=3, each of the
    # kT*kH*kW taps contributes only Cin(=3) lanes of the K axis, so assembling
    # the (Ho*Wo, K) patch tile in VMEM costs ~n_taps * Ho*Wo/8 masked vector
    # stores per frame (~77k vst.msk at 224x224) -- far more expensive than the
    # HBM traffic of the materialized bf16 patches it would remove.
    # TODO(synk): space-to-depth repack (fold the stride-2 grid into channels,
    # turning this into a 4x4 stride-1 conv over 12 channels) so tap groups
    # become lane-dense and the im2col HBM tensor can be dropped entirely.
    cols = []
    for dt in range(kT):
        for dh in range(kH):
            for dw in range(kW):
                cols.append(
                    xp[:,
                       dt:dt + sT * (To - 1) + 1:sT,
                       dh:dh + sH * (Ho - 1) + 1:sH,
                       dw:dw + sW * (Wo - 1) + 1:sW, :])
    patches = jnp.stack(cols, axis=4)            # (N,To,Ho,Wo, kT*kH*kW, Cin)
    M = N * To * Ho * Wo
    K = Cin * kT * kH * kW
    patches = patches.reshape(M, K).astype(jnp.bfloat16)   # rows in (n,t,h,w) order

    # weight -> (K, Cp) with matching (kt,kh,kw,ci) row order; zero-padded cols.
    w_mat = jnp.transpose(weight, (2, 3, 4, 1, 0)).reshape(K, Cout)
    w_mat = jnp.pad(w_mat, ((0, 0), (0, Cp - Cout))).astype(jnp.bfloat16)
    gamma_p = jnp.pad(gamma.astype(jnp.float32), (0, Cp - Cout))
    beta_p = jnp.pad(beta.astype(jnp.float32), (0, Cp - Cout))

    # ---- pass 1: tiled conv matmul -> per-channel sum / sum-of-squares ----
    # Large row tiles amortize per-grid-step overhead; the leading size-2
    # "parallel" axis lets both v7x TensorCores stream half of M each.
    half_rows = (M + 1) // 2
    TM = min(_round_up(tile_m, 8), _round_up(half_rows, 8))
    n_half = -(-half_rows // TM)                 # row tiles per half
    Mp = 2 * n_half * TM
    patches_p = jnp.pad(patches, ((0, Mp - M), (0, 0)))   # zero rows: no-op in sums

    sum_out, sq_out = pl.pallas_call(
        _conv_stats_kernel,
        grid=(2, n_half),
        in_specs=[pl.BlockSpec((TM, K), lambda h, i: (h * n_half + i, 0)),
                  pl.BlockSpec((K, Cp), lambda h, i: (0, 0))],       # weights resident
        out_specs=(pl.BlockSpec((8, Cp), lambda h, i: (h, 0)),       # per-half resident acc
                   pl.BlockSpec((8, Cp), lambda h, i: (h, 0))),
        out_shape=(jax.ShapeDtypeStruct((16, Cp), jnp.float32),
                   jax.ShapeDtypeStruct((16, Cp), jnp.float32)),
        compiler_params=pltpu.CompilerParams(
            dimension_semantics=("parallel", "arbitrary")),
    )(patches_p, w_mat)

    # Fold batch stats (biased variance, train-mode BN) into scale/shift.
    # Stats come from the same bf16-quantized matmul used in pass 2, so the two
    # passes are self-consistent; drift vs. an f32 reference stays within the
    # bf16 tolerance documented in the test below.
    sum_y = jnp.sum(sum_out, axis=0)
    sq_y = jnp.sum(sq_out, axis=0)
    mean = sum_y / M
    var = jnp.maximum(sq_y / M - mean * mean, 0.0)   # clamp E[y^2]-E[y]^2 >= 0
    inv = jax.lax.rsqrt(var + eps)
    scale = (gamma_p * inv).reshape(1, Cp)
    shift = (beta_p - mean * gamma_p * inv).reshape(1, Cp)

    # ---- pass 2: fused conv + BN-apply + ReLU + MaxPool[1,3,3]/[1,2,2]/[0,1,1] ----
    Hp = (Ho + 2 - 3) // 2 + 1
    Wp = (Wo + 2 - 3) // 2 + 1
    Hzp = 2 * Hp + 2                             # zpad rows (>= Ho+2, pool-read safe)
    Wzp = Wo + 2
    F = N * To
    patches_f = patches.reshape(F, Ho * Wo, K)   # frames are contiguous row groups

    kern2 = functools.partial(_conv_bn_relu_pool_kernel, Ho=Ho, Wo=Wo, Hp=Hp, Wp=Wp)
    pooled = pl.pallas_call(
        kern2,
        grid=(F,),
        in_specs=[pl.BlockSpec((1, Ho * Wo, K), lambda f: (f, 0, 0)),
                  pl.BlockSpec((K, Cp), lambda f: (0, 0)),
                  pl.BlockSpec((1, Cp), lambda f: (0, 0)),
                  pl.BlockSpec((1, Cp), lambda f: (0, 0))],
        out_specs=pl.BlockSpec((1, Hp, Wp, Cp), lambda f: (f, 0, 0, 0)),
        out_shape=jax.ShapeDtypeStruct((F, Hp, Wp, Cp), jnp.bfloat16),  # bf16 writeback
        scratch_shapes=[pltpu.VMEM((Hzp, Wzp, Cp), jnp.float32)],
        compiler_params=pltpu.CompilerParams(
            dimension_semantics=("parallel",),        # independent frames (megacore)
            vmem_limit_bytes=48 * 1024 * 1024),       # real stem sizes exceed the
    )(patches_f, w_mat, scale, shift)                 # 16/32 MiB default scoped limit

    # Un-pad channels, cast back to f32, return PyTorch-style NCDHW.
    # (If the consumer accepts channels-last bf16, return `pooled` reshaped to
    #  (N, To, Hp, Wp, Cout) instead and skip this extra HBM round trip.)
    out = pooled.reshape(N, To, Hp, Wp, Cp)[..., :Cout]
    out = jnp.transpose(out, (0, 4, 1, 2, 3)).astype(jnp.float32)
    # TODO(synk): BatchNorm running_mean/var EMA update (bn_mmt) is stateful
    # training bookkeeping and does not affect the forward output; omitted.
    return out


# ------------------------------ reference ---------------------------------- #

def _reference(x, weight, gamma, beta, kernel, stride, padding, eps=EPS):
    y = jax.lax.conv_general_dilated(
        x, weight, window_strides=stride,
        padding=[(p, p) for p in padding],
        dimension_numbers=("NCDHW", "OIDHW", "NCDHW"))
    mean = jnp.mean(y, axis=(0, 2, 3, 4), keepdims=True)
    var = jnp.mean(jnp.square(y - mean), axis=(0, 2, 3, 4), keepdims=True)
    y = (y - mean) / jnp.sqrt(var + eps) * gamma.reshape(1, -1, 1, 1, 1) \
        + beta.reshape(1, -1, 1, 1, 1)
    y = jnp.maximum(y, 0.0)
    y = jax.lax.reduce_window(
        y, -jnp.inf, jax.lax.max,
        window_dimensions=(1, 1, 1, 3, 3),
        window_strides=(1, 1, 1, 2, 2),
        padding=((0, 0), (0, 0), (0, 0), (1, 1), (1, 1)))
    return y


# -------------------------------- main -------------------------------------- #

if __name__ == "__main__":
    key = jax.random.PRNGKey(0)
    k1, k2, k3, k4 = jax.random.split(key, 4)

    # Small shapes consistent with the module: dim_in=3, dim_out=8,
    # kernel=[1,7,7], stride=[1,2,2], padding=[0,3,3]
    N, Cin, T, H, W = 2, 3, 4, 16, 16
    Cout = 8
    kernel, stride, padding = (1, 7, 7), (1, 2, 2), (0, 3, 3)

    x = jax.random.normal(k1, (N, Cin, T, H, W), jnp.float32)
    weight = jax.random.normal(k2, (Cout, Cin) + kernel, jnp.float32) * 0.1
    gamma = jax.random.uniform(k3, (Cout,), jnp.float32, 0.5, 1.5)
    beta = jax.random.normal(k4, (Cout,), jnp.float32) * 0.1

    # tile_m=128 so the toy problem (M = 512 rows) exercises the full 2 x 2
    # stats grid (parallel halves x reduction tiles); production sizes use the
    # 2048-row default.
    out = resnet_basic_stem(x, weight, gamma, beta, kernel=kernel, stride=stride,
                            padding=padding, tile_m=128)
    out = jax.block_until_ready(out)

    ref = _reference(x, weight, gamma, beta, kernel, stride, padding)
    assert out.shape == ref.shape, (out.shape, ref.shape)
    # Matmul operands and the pooled HBM writeback are bf16 (accumulation and
    # BN math in f32), so compare at a bf16-appropriate tolerance against the
    # full-f32 reference.
    np.testing.assert_allclose(np.asarray(out), np.asarray(ref),
                               rtol=3e-2, atol=3e-2)
    print("KERNEL_OK")
</pallas_src>

<mosaic_0001>
module attributes {stable_mosaic.version = 11 : i64} {
  func.func @_conv_stats_kernel(%arg0: i32, %arg1: i32, %arg2: memref<128x147xbf16, #tpu.memory_space<vmem>>, %arg3: memref<147x128xbf16, #tpu.memory_space<vmem>>, %arg4: memref<8x128xf32, #tpu.memory_space<vmem>>, %arg5: memref<8x128xf32, #tpu.memory_space<vmem>>) attributes {dimension_semantics = [#tpu.dimension_semantics<parallel>, #tpu.dimension_semantics<arbitrary>], iteration_bounds = array<i64: 2, 2>, scalar_prefetch = 0 : i64, scratch_operands = 0 : i64, tpu.core_type = #tpu.core_type<tc>, window_params = [{transform_indices = @transform_0, window_bounds = array<i64: 128, 147>}, {pipeline_mode = #tpu.pipeline_mode<synchronous>, transform_indices = @transform_1, window_bounds = array<i64: 147, 128>}, {transform_indices = @transform_2, window_bounds = array<i64: 8, 128>}, {transform_indices = @transform_3, window_bounds = array<i64: 8, 128>}]} {
    %c0_i32 = arith.constant 0 : i32
    %0 = arith.cmpi eq, %arg1, %c0_i32 : i32
    %1 = arith.extui %0 : i1 to i32
    %c0_i32_0 = arith.constant 0 : i32
    %2 = arith.cmpi ne, %1, %c0_i32_0 : i32
    scf.if %2 {
      %cst_14 = arith.constant 0.000000e+00 : f32
      %16 = vector.broadcast %cst_14 : f32 to vector<8x128xf32>
      %c0_15 = arith.constant 0 : index
      %c0_16 = arith.constant 0 : index
      %17 = vector.load %arg4[%c0_15, %c0_16] : memref<8x128xf32, #tpu.memory_space<vmem>>, vector<8x128xf32>
      tpu.vector_store %arg4[%c0_15, %c0_16], %16 {strides = array<i32>} : memref<8x128xf32, #tpu.memory_space<vmem>>, vector<8x128xf32>,
      %cst_17 = arith.constant 0.000000e+00 : f32
      %18 = vector.broadcast %cst_17 : f32 to vector<8x128xf32>
      %c0_18 = arith.constant 0 : index
      %c0_19 = arith.constant 0 : index
      %19 = vector.load %arg5[%c0_18, %c0_19] : memref<8x128xf32, #tpu.memory_space<vmem>>, vector<8x128xf32>
      tpu.vector_store %arg5[%c0_18, %c0_19], %18 {strides = array<i32>} : memref<8x128xf32, #tpu.memory_space<vmem>>, vector<8x128xf32>,
    } else {
    }
    %c0 = arith.constant 0 : index
    %c0_1 = arith.constant 0 : index
    %3 = vector.load %arg2[%c0, %c0_1] : memref<128x147xbf16, #tpu.memory_space<vmem>>, vector<128x147xbf16>
    %c0_2 = arith.constant 0 : index
    %c0_3 = arith.constant 0 : index
    %4 = vector.load %arg3[%c0_2, %c0_3] : memref<147x128xbf16, #tpu.memory_space<vmem>>, vector<147x128xbf16>
    %cst = arith.constant dense<0.000000e+00> : vector<128x128xf32>
    %5 = tpu.matmul %3, %4, %cst {dimension_numbers = #tpu.dot_dimension_numbers<[1], [0], [0], [1], [0, 0, 1, 1], [], []>} : vector<128x147xbf16>, vector<147x128xbf16>, vector<128x128xf32> -> vector<128x128xf32>
    %6 = vector.shape_cast %5 : vector<128x128xf32> to vector<16x8x128xf32>
    %c0_4 = arith.constant 0 : index
    %c0_5 = arith.constant 0 : index
    %7 = vector.load %arg4[%c0_4, %c0_5] : memref<8x128xf32, #tpu.memory_space<vmem>>, vector<8x128xf32>
    %cst_6 = arith.constant dense<0.000000e+00> : vector<8x128xf32>
    %8 = vector.multi_reduction <add>, %6, %cst_6 [0] : vector<16x8x128xf32> to vector<8x128xf32>
    %9 = arith.addf %7, %8 : vector<8x128xf32>
    %c0_7 = arith.constant 0 : index
    %c0_8 = arith.constant 0 : index
    %10 = vector.load %arg4[%c0_7, %c0_8] : memref<8x128xf32, #tpu.memory_space<vmem>>, vector<8x128xf32>
    tpu.vector_store %arg4[%c0_7, %c0_8], %9 {strides = array<i32>} : memref<8x128xf32, #tpu.memory_space<vmem>>, vector<8x128xf32>,
    %c0_9 = arith.constant 0 : index
    %c0_10 = arith.constant 0 : index
    %11 = vector.load %arg5[%c0_9, %c0_10] : memref<8x128xf32, #tpu.memory_space<vmem>>, vector<8x128xf32>
    %12 = arith.mulf %6, %6 : vector<16x8x128xf32>
    %cst_11 = arith.constant dense<0.000000e+00> : vector<8x128xf32>
    %13 = vector.multi_reduction <add>, %12, %cst_11 [0] : vector<16x8x128xf32> to vector<8x128xf32>
    %14 = arith.addf %11, %13 : vector<8x128xf32>
    %c0_12 = arith.constant 0 : index
    %c0_13 = arith.constant 0 : index
    %15 = vector.load %arg5[%c0_12, %c0_13] : memref<8x128xf32, #tpu.memory_space<vmem>>, vector<8x128xf32>
    tpu.vector_store %arg5[%c0_12, %c0_13], %14 {strides = array<i32>} : memref<8x128xf32, #tpu.memory_space<vmem>>, vector<8x128xf32>,
    return
  }
  func.func @transform_0(%arg0: i32, %arg1: i32) -> (i32, i32) {
    %c2_i32 = arith.constant 2 : i32
    %0 = arith.muli %arg0, %c2_i32 : i32
    %1 = arith.addi %0, %arg1 : i32
    %c0_i32 = arith.constant 0 : i32
    %c0_i32_0 = arith.constant 0 : i32
    return %1, %c0_i32 : i32, i32
  }
  func.func @transform_1(%arg0: i32, %arg1: i32) -> (i32, i32) {
    %c0_i32 = arith.constant 0 : i32
    %c0_i32_0 = arith.constant 0 : i32
    %c0_i32_1 = arith.constant 0 : i32
    return %c0_i32, %c0_i32_0 : i32, i32
  }
  func.func @transform_2(%arg0: i32, %arg1: i32) -> (i32, i32) {
    %c0_i32 = arith.constant 0 : i32
    %c0_i32_0 = arith.constant 0 : i32
    return %arg0, %c0_i32 : i32, i32
  }
  func.func @transform_3(%arg0: i32, %arg1: i32) -> (i32, i32) {
    %c0_i32 = arith.constant 0 : i32
    %c0_i32_0 = arith.constant 0 : i32
    return %arg0, %c0_i32 : i32, i32
  }
}

module attributes {stable_mosaic.version = 11 : i64} {
  func.func @_conv_bn_relu_pool_kernel(%arg0: i32, %arg1: memref<1x64x147xbf16, #tpu.memory_space<vmem>>, %arg2: memref<147x128xbf16, #tpu.memory_space<vmem>>, %arg3: memref<1x128xf32, #tpu.memory_space<vmem>>, %arg4: memref<1x128xf32, #tpu.memory_space<vmem>>, %arg5: memref<1x4x4x128xbf16, #tpu.memory_space<vmem>>, %arg6: memref<10x10x128xf32, #tpu.memory_space<vmem>>) attributes {dimension_semantics = [#tpu.dimension_semantics<parallel>], iteration_bounds = array<i64: 8>, scalar_prefetch = 0 : i64, scratch_operands = 1 : i64, tpu.core_type = #tpu.core_type<tc>, window_params = [{transform_indices = @transform_0, window_bounds = array<i64: 1, 64, 147>}, {pipeline_mode = #tpu.pipeline_mode<synchronous>, transform_indices = @transform_1, window_bounds = array<i64: 147, 128>}, {pipeline_mode = #tpu.pipeline_mode<synchronous>, transform_indices = @transform_2, window_bounds = array<i64: 1, 128>}, {pipeline_mode = #tpu.pipeline_mode<synchronous>, transform_indices = @transform_3, window_bounds = array<i64: 1, 128>}, {transform_indices = @transform_4, window_bounds = array<i64: 1, 4, 4, 128>}]} {
    %c0 = arith.constant 0 : index
    %c0_0 = arith.constant 0 : index
    %c0_1 = arith.constant 0 : index
    %0 = vector.load %arg1[%c0, %c0_0, %c0_1] : memref<1x64x147xbf16, #tpu.memory_space<vmem>>, vector<1x64x147xbf16>
    %1 = vector.shape_cast %0 : vector<1x64x147xbf16> to vector<64x147xbf16>
    %c0_2 = arith.constant 0 : index
    %c0_3 = arith.constant 0 : index
    %2 = vector.load %arg2[%c0_2, %c0_3] : memref<147x128xbf16, #tpu.memory_space<vmem>>, vector<147x128xbf16>
    %cst = arith.constant dense<0.000000e+00> : vector<64x128xf32>
    %3 = tpu.matmul %1, %2, %cst {dimension_numbers = #tpu.dot_dimension_numbers<[1], [0], [0], [1], [0, 0, 1, 1], [], []>} : vector<64x147xbf16>, vector<147x128xbf16>, vector<64x128xf32> -> vector<64x128xf32>
    %c0_4 = arith.constant 0 : index
    %c0_5 = arith.constant 0 : index
    %4 = vector.load %arg3[%c0_4, %c0_5] : memref<1x128xf32, #tpu.memory_space<vmem>>, vector<1x128xf32>
    %5 = vector.broadcast %4 : vector<1x128xf32> to vector<64x128xf32>
    %6 = arith.mulf %3, %5 : vector<64x128xf32>
    %c0_6 = arith.constant 0 : index
    %c0_7 = arith.constant 0 : index
    %7 = vector.load %arg4[%c0_6, %c0_7] : memref<1x128xf32, #tpu.memory_space<vmem>>, vector<1x128xf32>
    %8 = vector.broadcast %7 : vector<1x128xf32> to vector<64x128xf32>
    %9 = arith.addf %6, %8 : vector<64x128xf32>
    %cst_8 = arith.constant 0.000000e+00 : f32
    %10 = vector.broadcast %cst_8 : f32 to vector<64x128xf32>
    %11 = arith.maximumf %9, %10 : vector<64x128xf32>
    %cst_9 = arith.constant 0.000000e+00 : f32
    %12 = vector.broadcast %cst_9 : f32 to vector<1x10x128xf32>
    %c0_10 = arith.constant 0 : index
    %c0_11 = arith.constant 0 : index
    %c0_12 = arith.constant 0 : index
    %13 = vector.load %arg6[%c0_10, %c0_11, %c0_12] : memref<10x10x128xf32, #tpu.memory_space<vmem>>, vector<1x10x128xf32>
    tpu.vector_store %arg6[%c0_10, %c0_11, %c0_12], %12 {strides = array<i32>} : memref<10x10x128xf32, #tpu.memory_space<vmem>>, vector<1x10x128xf32>,
    %cst_13 = arith.constant 0.000000e+00 : f32
    %14 = vector.broadcast %cst_13 : f32 to vector<1x10x128xf32>
    %c9 = arith.constant 9 : index
    %c0_14 = arith.constant 0 : index
    %c0_15 = arith.constant 0 : index
    %15 = vector.load %arg6[%c9, %c0_14, %c0_15] : memref<10x10x128xf32, #tpu.memory_space<vmem>>, vector<1x10x128xf32>
    tpu.vector_store %arg6[%c9, %c0_14, %c0_15], %14 {strides = array<i32>} : memref<10x10x128xf32, #tpu.memory_space<vmem>>, vector<1x10x128xf32>,
    %cst_16 = arith.constant 0.000000e+00 : f32
    %16 = vector.broadcast %cst_16 : f32 to vector<10x1x128xf32>
    %c0_17 = arith.constant 0 : index
    %c0_18 = arith.constant 0 : index
    %c0_19 = arith.constant 0 : index
    %17 = vector.load %arg6[%c0_17, %c0_18, %c0_19] : memref<10x10x128xf32, #tpu.memory_space<vmem>>, vector<10x1x128xf32>
    tpu.vector_store %arg6[%c0_17, %c0_18, %c0_19], %16 {strides = array<i32>} : memref<10x10x128xf32, #tpu.memory_space<vmem>>, vector<10x1x128xf32>,
    %cst_20 = arith.constant 0.000000e+00 : f32
    %18 = vector.broadcast %cst_20 : f32 to vector<10x1x128xf32>
    %c0_21 = arith.constant 0 : index
    %c9_22 = arith.constant 9 : index
    %c0_23 = arith.constant 0 : index
    %19 = vector.load %arg6[%c0_21, %c9_22, %c0_23] : memref<10x10x128xf32, #tpu.memory_space<vmem>>, vector<10x1x128xf32>
    tpu.vector_store %arg6[%c0_21, %c9_22, %c0_23], %18 {strides = array<i32>} : memref<10x10x128xf32, #tpu.memory_space<vmem>>, vector<10x1x128xf32>,
    %20 = vector.shape_cast %11 : vector<64x128xf32> to vector<8x8x128xf32>
    %c1 = arith.constant 1 : index
    %c1_24 = arith.constant 1 : index
    %c0_25 = arith.constant 0 : index
    %21 = vector.load %arg6[%c1, %c1_24, %c0_25] : memref<10x10x128xf32, #tpu.memory_space<vmem>>, vector<8x8x128xf32>
    tpu.vector_store %arg6[%c1, %c1_24, %c0_25], %20 {strides = array<i32>} : memref<10x10x128xf32, #tpu.memory_space<vmem>>, vector<8x8x128xf32>,
    %c0_26 = arith.constant 0 : index
    %c0_27 = arith.constant 0 : index
    %c0_28 = arith.constant 0 : index
    %22 = tpu.strided_load %arg6[%c0_26, %c0_27, %c0_28] {strides = array<i32: 1, 2, 1>} : memref<10x10x128xf32, #tpu.memory_space<vmem>>, vector<10x4x128xf32>
    %c0_29 = arith.constant 0 : index
    %c1_30 = arith.constant 1 : index
    %c0_31 = arith.constant 0 : index
    %23 = tpu.strided_load %arg6[%c0_29, %c1_30, %c0_31] {strides = array<i32: 1, 2, 1>} : memref<10x10x128xf32, #tpu.memory_space<vmem>>, vector<10x4x128xf32>
    %24 = arith.maximumf %22, %23 : vector<10x4x128xf32>
    %c0_32 = arith.constant 0 : index
    %c2 = arith.constant 2 : index
    %c0_33 = arith.constant 0 : index
    %25 = tpu.strided_load %arg6[%c0_32, %c2, %c0_33] {strides = array<i32: 1, 2, 1>} : memref<10x10x128xf32, #tpu.memory_space<vmem>>, vector<10x4x128xf32>
    %26 = arith.maximumf %24, %25 : vector<10x4x128xf32>
    %27 = vector.extract_strided_slice %26 {offsets = [0, 0, 0], sizes = [8, 4, 128], strides = [1, 1, 1]} : vector<10x4x128xf32> to vector<8x4x128xf32>
    %28 = vector.shape_cast %27 : vector<8x4x128xf32> to vector<4x2x4x128xf32>
    %29 = vector.extract_strided_slice %26 {offsets = [2, 0, 0], sizes = [8, 4, 128], strides = [1, 1, 1]} : vector<10x4x128xf32> to vector<8x4x128xf32>
    %30 = vector.shape_cast %29 : vector<8x4x128xf32> to vector<4x2x4x128xf32>
    %31 = vector.extract_strided_slice %30 {offsets = [0, 0, 0, 0], sizes = [4, 1, 4, 128], strides = [1, 1, 1, 1]} : vector<4x2x4x128xf32> to vector<4x1x4x128xf32>
    %32 = vector.shape_cast %31 : vector<4x1x4x128xf32> to vector<4x4x128xf32>
    %33 = vector.extract_strided_slice %28 {offsets = [0, 0, 0, 0], sizes = [4, 1, 4, 128], strides = [1, 1, 1, 1]} : vector<4x2x4x128xf32> to vector<4x1x4x128xf32>
    %34 = vector.shape_cast %33 : vector<4x1x4x128xf32> to vector<4x4x128xf32>
    %35 = vector.extract_strided_slice %28 {offsets = [0, 1, 0, 0], sizes = [4, 1, 4, 128], strides = [1, 1, 1, 1]} : vector<4x2x4x128xf32> to vector<4x1x4x128xf32>
    %36 = vector.shape_cast %35 : vector<4x1x4x128xf32> to vector<4x4x128xf32>
    %37 = arith.maximumf %34, %36 : vector<4x4x128xf32>
    %38 = arith.maximumf %37, %32 : vector<4x4x128xf32>
    %39 = arith.truncf %38 : vector<4x4x128xf32> to vector<4x4x128xbf16>
    %c0_34 = arith.constant 0 : index
    %c0_35 = arith.constant 0 : index
    %c0_36 = arith.constant 0 : index
    %c0_37 = arith.constant 0 : index
    %40 = vector.load %arg5[%c0_34, %c0_35, %c0_36, %c0_37] : memref<1x4x4x128xbf16, #tpu.memory_space<vmem>>, vector<1x4x4x128xbf16>
    %41 = vector.shape_cast %40 : vector<1x4x4x128xbf16> to vector<4x4x128xbf16>
    %42 = vector.shape_cast %39 : vector<4x4x128xbf16> to vector<1x4x4x128xbf16>
    tpu.vector_store %arg5[%c0_34, %c0_35, %c0_36, %c0_37], %42 {strides = array<i32>} : memref<1x4x4x128xbf16, #tpu.memory_space<vmem>>, vector<1x4x4x128xbf16>,
    return
  }
  func.func @transform_0(%arg0: i32) -> (i32, i32, i32) {
    %c0_i32 = arith.constant 0 : i32
    %c0_i32_0 = arith.constant 0 : i32
    %c0_i32_1 = arith.constant 0 : i32
    return %arg0, %c0_i32, %c0_i32_0 : i32, i32, i32
  }
  func.func @transform_1(%arg0: i32) -> (i32, i32) {
    %c0_i32 = arith.constant 0 : i32
    %c0_i32_0 = arith.constant 0 : i32
    %c0_i32_1 = arith.constant 0 : i32
    return %c0_i32, %c0_i32_0 : i32, i32
  }
  func.func @transform_2(%arg0: i32) -> (i32, i32) {
    %c0_i32 = arith.constant 0 : i32
    %c0_i32_0 = arith.constant 0 : i32
    %c0_i32_1 = arith.constant 0 : i32
    return %c0_i32, %c0_i32_0 : i32, i32
  }
  func.func @transform_3(%arg0: i32) -> (i32, i32) {
    %c0_i32 = arith.constant 0 : i32
    %c0_i32_0 = arith.constant 0 : i32
    %c0_i32_1 = arith.constant 0 : i32
    return %c0_i32, %c0_i32_0 : i32, i32
  }
  func.func @transform_4(%arg0: i32) -> (i32, i32, i32, i32) {
    %c0_i32 = arith.constant 0 : i32
    %c0_i32_0 = arith.constant 0 : i32
    %c0_i32_1 = arith.constant 0 : i32
    %c0_i32_2 = arith.constant 0 : i32
    return %arg0, %c0_i32, %c0_i32_0, %c0_i32_1 : i32, i32, i32, i32
  }
}

</mosaic_0001>

<llo_original>
// kernel: resnet_basic_stem.2
$region0: #{resnet_basic_stem.2}
  #allocation0 [shape = 'u32[]', space=smem, size = 0x4, offset = 0x4, fixed_abs, tag = 'smem constant byte address 0x4 - core index']
  #allocation1 [shape = 'u32[144,128]{1,0:T(1,128)}', space=vmem, size = 0x12000, scoped, tag = 'internal scratch']
  %s0 = inlined_call_operand.vmem [shape: bf16[512,147], index: 0, kind: input, shape index: {}]
  %s1 = inlined_call_operand.vmem [shape: bf16[147,128], index: 1, kind: input, shape index: {}]
  %s2 = inlined_call_operand.vmem [shape: f32[16,128], index: 2, kind: output, shape index: {0}]
  %s3 = inlined_call_operand.vmem [shape: f32[16,128], index: 3, kind: output, shape index: {1}]
  %4 = xla_tuple %s2, %s3
  %s5 = sld [smem:[#allocation0]]
  $region53: #{resnet_basic_stem.2} parent=0
    _
  %s7 = ssub.s32 1, %s5
  %s8 = scalar_select 0, %s7, %s5
  loop: start=0, step=1, limit=6
  $region2: #{resnet_basic_stem.2} parent=0 // loop_pre_header
    _
  $region3: #{resnet_basic_stem.2} parent=0 // loop_header
    %s10 = sphi 0, %s14
    %p11 = scmp.ge.s32.totalorder %s10, 6
    %s17 = sphi 0, %s29
    %s18 = sphi 0, %s25
    %s19 = sphi 0, %s17
    %s20 = sphi 0, %s18
    %s21 = sphi 0, %s19
    %s22 = sphi 0, %s20
    %s36 = sphi 0, %s38
    %s39 = sphi 0, %s36
    %s40 = sphi 0, %s39
    %s56 = sphi 0, %s40
    %s60 = sphi 0, %s60
    %s62 = sphi 0, %s60
    %s63 = sphi 0, %s62
    %s77 = sphi 0, %s63
    %s83 = sphi 0, %s85
    %s86 = sphi 0, %s83
    %s87 = sphi 0, %s86
    %s103 = sphi 0, %s87
    %s109 = sphi 0, %s111
    %s112 = sphi 0, %s109
    %s113 = sphi 0, %s112
    %s129 = sphi 0, %s113
  $region4: #{resnet_basic_stem.2} parent=0 // loop_header_branch
    %13 = sbr.rel (%p11) target = $region8
  $region5: #{resnet_basic_stem.2} parent=0 // loop_body
    %s15 = ssub.s32 %s10, 1
    %s16 = ssub.s32 %s10, 2
    %s23 = sadd.s32 1, %s18
    %p24 = scmp.ge.s32.totalorder %s23, 2
    %s25 = scalar_select %p24, 0, %s23
    %s26 = sadd.s32 1, %s17
    %s27 = scalar_select %p24, %s26, %s17
    %p28 = scmp.ge.s32.totalorder %s27, 2
    %s29 = scalar_select %p28, 0, %s27
    %s30 = smul.u32 %s17, 2
    %s31 = sadd.s32 %s30, %s18
    %s32 = smul.u32 %s29, 2
    %s33 = sadd.s32 %s32, %s25
    %s34 = ssub.s32 %s31, %s33
    %p35 = scmp.eq.s32.totalorder %s34, 0
    %s37 = sadd.s32 %s36, 1
    %s38 = scalar_select %p35, %s36, %s37
    %p41 = pneg %p35
    %p42 = scmp.eq.s32.totalorder %s10, 3
    %p43 = por %p41, %p42
    %p44 = scmp.ne.s32.totalorder %s36, %s39
    %p45 = scmp.eq.s32.totalorder %s10, 0
    %p46 = por %p44, %p45
    %p47 = scmp.ne.s32.totalorder %s36, %s39
    %p48 = scmp.eq.s32.totalorder %s15, 3
    %p49 = por %p47, %p48
    %p50 = scmp.ne.s32.totalorder %s39, %s40
    %p51 = scmp.eq.s32.totalorder %s15, 0
    %p52 = por %p50, %p51
    %p53 = scmp.ne.s32.totalorder %s39, %s40
    %p54 = scmp.eq.s32.totalorder %s16, 3
    %p55 = por %p53, %p54
    %p57 = scmp.ne.s32.totalorder %s40, %s56
    %p58 = scmp.eq.s32.totalorder %s16, 0
    %p59 = por %p57, %p58
    %s61 = sadd.s32 %s60, 1
    %p64 = scmp.eq.s32.totalorder %s10, 3
    %p65 = scmp.ne.s32.totalorder %s60, %s62
    %p66 = scmp.eq.s32.totalorder %s10, 0
    %p67 = por %p65, %p66
    %p68 = scmp.ne.s32.totalorder %s60, %s62
    %p69 = scmp.eq.s32.totalorder %s15, 3
    %p70 = por %p68, %p69
    %p71 = scmp.ne.s32.totalorder %s62, %s63
    %p72 = scmp.eq.s32.totalorder %s15, 0
    %p73 = por %p71, %p72
    %p74 = scmp.ne.s32.totalorder %s62, %s63
    %p75 = scmp.eq.s32.totalorder %s16, 3
    %p76 = por %p74, %p75
    %p78 = scmp.ne.s32.totalorder %s63, %s77
    %p79 = scmp.eq.s32.totalorder %s16, 0
    %p80 = por %p78, %p79
    %s81 = ssub.s32 %s17, %s29
    %p82 = scmp.eq.s32.totalorder %s81, 0
    %s84 = sadd.s32 %s83, 1
    %s85 = scalar_select %p82, %s83, %s84
    %p88 = pneg %p82
    %p89 = scmp.eq.s32.totalorder %s10, 3
    %p90 = por %p88, %p89
    %p91 = scmp.ne.s32.totalorder %s83, %s86
    %p92 = scmp.eq.s32.totalorder %s10, 0
    %p93 = por %p91, %p92
    %p94 = scmp.ne.s32.totalorder %s83, %s86
    %p95 = scmp.eq.s32.totalorder %s15, 3
    %p96 = por %p94, %p95
    %p97 = scmp.ne.s32.totalorder %s86, %s87
    %p98 = scmp.eq.s32.totalorder %s15, 0
    %p99 = por %p97, %p98
    %p100 = scmp.ne.s32.totalorder %s86, %s87
    %p101 = scmp.eq.s32.totalorder %s16, 3
    %p102 = por %p100, %p101
    %p104 = scmp.ne.s32.totalorder %s87, %s103
    %p105 = scmp.eq.s32.totalorder %s16, 0
    %p106 = por %p104, %p105
    %s107 = ssub.s32 %s17, %s29
    %p108 = scmp.eq.s32.totalorder %s107, 0
    %s110 = sadd.s32 %s109, 1
    %s111 = scalar_select %p108, %s109, %s110
    %p114 = pneg %p108
    %p115 = scmp.eq.s32.totalorder %s10, 3
    %p116 = por %p114, %p115
    %p117 = scmp.ne.s32.totalorder %s109, %s112
    %p118 = scmp.eq.s32.totalorder %s10, 0
    %p119 = por %p117, %p118
    %p120 = scmp.ne.s32.totalorder %s109, %s112
    %p121 = scmp.eq.s32.totalorder %s15, 3
    %p122 = por %p120, %p121
    %p123 = scmp.ne.s32.totalorder %s112, %s113
    %p124 = scmp.eq.s32.totalorder %s15, 0
    %p125 = por %p123, %p124
    %p126 = scmp.ne.s32.totalorder %s112, %s113
    %p127 = scmp.eq.s32.totalorder %s16, 3
    %p128 = por %p126, %p127
    %p130 = scmp.ne.s32.totalorder %s113, %s129
    %p131 = scmp.eq.s32.totalorder %s16, 0
    %p132 = por %p130, %p131
    %p133 = scmp.le.s32.totalorder 1, %s10
    %p134 = scmp.lt.s32.totalorder %s10, 5
    %p135 = pnand %p133, %p134
    %p136 = pneg %p135
    // Predicated region
    $region9: #{resnet_basic_stem.2} parent=5 // pred_check
      _
    $region10: #{resnet_basic_stem.2} parent=5 // pred_check_branch
      %138 = sbr.rel (%p135) target = $region12
    $region11: #{resnet_basic_stem.2} parent=5 // pred_region
      %s139 = ssub.s32 %s10, 1
      // Predicated region
      $region13: #{resnet_basic_stem.2} parent=11 // pred_check
        %p140 = pneg %p73
      $region14: #{resnet_basic_stem.2} parent=11 // pred_check_branch
        %142 = sbr.rel (%p140) target = $region16
      $region15: #{resnet_basic_stem.2} parent=11 // pred_region
        _
      $region16: #{resnet_basic_stem.2} parent=11 // pred_fallthru
        _
    $region12: #{resnet_basic_stem.2} parent=5 // pred_fallthru
      _
    %p143 = scmp.lt.s32.totalorder %s10, 4
    // Predicated region
    $region17: #{resnet_basic_stem.2} parent=5 // pred_check
      %p144 = pneg %p143
    $region18: #{resnet_basic_stem.2} parent=5 // pred_check_branch
      %146 = sbr.rel (%p144) target = $region20
    $region19: #{resnet_basic_stem.2} parent=5 // pred_region
      // Predicated region
      $region21: #{resnet_basic_stem.2} parent=19 // pred_check
        %p147 = pneg %p46
      $region22: #{resnet_basic_stem.2} parent=19 // pred_check_branch
        %149 = sbr.rel (%p147) target = $region24
      $region23: #{resnet_basic_stem.2} parent=19 // pred_region
        %s150 = smul.u32 %s17, 2
        %s151 = sadd.s32 %s150, %s18
        %s152 = smul.u32 16, %s151
        %p153 = scmp.lt.s32.totalorder %s152, 63
        %s154 = scalar_select %p153, %s152, 63
        %s155 = smul.addr %s154, 2
        %s156 = smul.addr %s155, 4
        %s157 = scalar_lea.vmem %s0, %s156
        %s158 = smul.u32 %s17, 2
        %s159 = sadd.s32 %s158, %s18
        %s160 = smul.u32 16, %s159
      $region24: #{resnet_basic_stem.2} parent=19 // pred_fallthru
        _
    $region20: #{resnet_basic_stem.2} parent=5 // pred_fallthru
      _
    %p161 = scmp.le.s32.totalorder 1, %s10
    %p162 = scmp.lt.s32.totalorder %s10, 5
    %p163 = pnand %p161, %p162
    %p164 = pneg %p163
    // Predicated region
    $region25: #{resnet_basic_stem.2} parent=5 // pred_check
      _
    $region26: #{resnet_basic_stem.2} parent=5 // pred_check_branch
      %166 = sbr.rel (%p163) target = $region28
    $region27: #{resnet_basic_stem.2} parent=5 // pred_region
      %s167 = ssub.s32 %s10, 1
      %s168 = smul.u32 %s19, 2
      %s169 = sadd.s32 %s168, %s20
      %s170 = smul.u32 16, %s169
      %p171 = scmp.lt.s32.totalorder %s170, 63
      %s172 = scalar_select %p171, %s170, 63
      %s173 = smul.addr %s172, 2
      %s174 = smul.addr %s173, 4
      %s175 = scalar_lea.vmem %s0, %s174
      %p176 = pneg %p52
      %p177 = pneg %p49
      %p178 = pneg %p73
      %p179 = pneg %p70
      %p180 = pneg %p99
      %p181 = pneg %p96
      %p182 = scmp.lt.s32.totalorder %s19, 1
      %s183 = scalar_select %p182, %s19, 1
      %s184 = smul.addr %s183, 8
      %s185 = scalar_lea.vmem %s2, %s184
      %p186 = pneg %p125
      %p187 = pneg %p122
      %p188 = scmp.lt.s32.totalorder %s19, 1
      %s189 = scalar_select %p188, %s19, 1
      %s190 = smul.addr %s189, 8
      %s191 = scalar_lea.vmem %s3, %s190
      %s192 = smul.u32 %s19, 2
      %s193 = sadd.s32 %s192, %s20
      %s194 = smul.u32 16, %s193
      %p195 = scmp.lt.s32.totalorder %s194, 63
      %s196 = scalar_select %p195, %s194, 63
      %s197 = smul.addr %s196, 2
      %s198 = smul.addr %s197, 4
      %s199 = scalar_lea.vmem %s0, %s198
      %s200 = smul.u32 %s19, 2
      %s201 = sadd.s32 %s200, %s20
      %s202 = smul.u32 16, %s201
      %p203 = scmp.lt.s32.totalorder %s19, 1
      %s204 = scalar_select %p203, %s19, 1
      %s205 = smul.addr %s204, 8
      %s206 = scalar_lea.vmem %s2, %s205
      %p207 = scmp.lt.s32.totalorder %s19, 1
      %s208 = scalar_select %p207, %s19, 1
      %s209 = smul.addr %s208, 8
      %s210 = scalar_lea.vmem %s3, %s209
      %p212 = scmp.eq.s32.totalorder %s20, 0
      // Predicated region
      $region29: #{resnet_basic_stem.2} parent=27 // pred_check
        %p213 = pneg %p212
      $region30: #{resnet_basic_stem.2} parent=27 // pred_check_branch
        %215 = sbr.rel (%p213) target = $region32
      $region31: #{resnet_basic_stem.2} parent=27 // pred_region
        %216 = vst [vmem:[%s206] sm:$0xff] 0.0
        %217 = vst [vmem:[%s210] sm:$0xff] 0.0
      $region32: #{resnet_basic_stem.2} parent=27 // pred_fallthru
        _
      %v218 = vld [vmem:[%s199] sm:$0xff]
      %v219 = vld [vmem:[%s199 + $0x8] sm:$0xff]
      %v220 = vld [vmem:[%s199 + $0x10] sm:$0xff]
      %v221 = vld [vmem:[%s199 + $0x18] sm:$0xff]
      %v222 = vld [vmem:[%s199 + $0x20] sm:$0xff]
      %v223 = vld [vmem:[%s199 + $0x28] sm:$0xff]
      %v224 = vld [vmem:[%s199 + $0x30] sm:$0xff]
      %v225 = vld [vmem:[%s199 + $0x38] sm:$0xff]
      %v226 = vld [vmem:[%s199 + $0x40] sm:$0xff]
      %v227 = vld [vmem:[%s199 + $0x48] sm:$0xff]
      %v228 = vld [vmem:[%s199 + $0x50] sm:$0xff]
      %v229 = vld [vmem:[%s199 + $0x58] sm:$0xff]
      %v230 = vld [vmem:[%s199 + $0x60] sm:$0xff]
      %v231 = vld [vmem:[%s199 + $0x68] sm:$0xff]
      %v232 = vld [vmem:[%s199 + $0x70] sm:$0xff]
      %v233 = vld [vmem:[%s199 + $0x78] sm:$0xff]
      %v234 = vld [vmem:[%s1] sm:$0xf]
      %v235 = vld [vmem:[%s1 + $0x4] sm:$0xf]
      %v236 = vld [vmem:[%s1 + $0x8] sm:$0xf]
      %v237 = vld [vmem:[%s1 + $0xc] sm:$0xf]
      %v238 = vld [vmem:[%s1 + $0x10] sm:$0xf]
      %v239 = vld [vmem:[%s1 + $0x14] sm:$0xf]
      %v240 = vld [vmem:[%s1 + $0x18] sm:$0xf]
      %v241 = vld [vmem:[%s1 + $0x1c] sm:$0xf]
      %v242 = vld [vmem:[%s1 + $0x20] sm:$0xf]
      %v243 = vld [vmem:[%s1 + $0x24] sm:$0xf]
      %v244 = vld [vmem:[%s1 + $0x28] sm:$0xf]
      %v245 = vld [vmem:[%s1 + $0x2c] sm:$0xf]
      %v246 = vld [vmem:[%s1 + $0x30] sm:$0xf]
      %v247 = vld [vmem:[%s1 + $0x34] sm:$0xf]
      %v248 = vld [vmem:[%s1 + $0x38] sm:$0xf]
      %v249 = vld [vmem:[%s1 + $0x3c] sm:$0xf]
      %v250 = vld [vmem:[%s1 + $0x40] sm:$0xf]
      %v251 = vld [vmem:[%s1 + $0x44] sm:$0xf]
      %v252 = vld [vmem:[%s1 + $0x48] sm:$0x3]
      %v269 = vunpack.c.l.b16 %v218
      %v270 = vunpack.c.h.b16 %v218
      %v271 = vunpack.c.l.b16 %v219
      %v272 = vunpack.c.h.b16 %v219
      %v273 = vunpack.c.l.b16 %v220
      %v274 = vunpack.c.h.b16 %v220
      %v275 = vunpack.c.l.b16 %v221
      %v276 = vunpack.c.h.b16 %v221
      %v277 = vunpack.c.l.b16 %v222
      %v278 = vunpack.c.h.b16 %v222
      %v279 = vunpack.c.l.b16 %v223
      %v280 = vunpack.c.h.b16 %v223
      %v281 = vunpack.c.l.b16 %v224
      %v282 = vunpack.c.h.b16 %v224
      %v283 = vunpack.c.l.b16 %v225
      %v284 = vunpack.c.h.b16 %v225
      %v285 = vunpack.c.l.b16 %v226
      %v286 = vunpack.c.h.b16 %v226
      %v287 = vunpack.c.l.b16 %v227
      %v288 = vunpack.c.h.b16 %v227
      %v289 = vunpack.c.l.b16 %v228
      %v290 = vunpack.c.h.b16 %v228
      %v291 = vunpack.c.l.b16 %v229
      %v292 = vunpack.c.h.b16 %v229
      %v293 = vunpack.c.l.b16 %v230
      %v294 = vunpack.c.h.b16 %v230
      %v295 = vunpack.c.l.b16 %v231
      %v296 = vunpack.c.h.b16 %v231
      %v297 = vunpack.c.l.b16 %v232
      %v298 = vunpack.c.h.b16 %v232
      %v299 = vunpack.c.l.b16 %v233
      %v300 = vunpack.c.h.b16 %v233
      %v301 = vpack.c.b16 %v271, %v269
      %v302 = vpack.c.b16 %v272, %v270
      %v303 = vpack.c.b16 %v275, %v273
      %v304 = vpack.c.b16 %v276, %v274
      %v305 = vpack.c.b16 %v279, %v277
      %v306 = vpack.c.b16 %v280, %v278
      %v307 = vpack.c.b16 %v283, %v281
      %v308 = vpack.c.b16 %v284, %v282
      %v309 = vpack.c.b16 %v287, %v285
      %v310 = vpack.c.b16 %v288, %v286
      %v311 = vpack.c.b16 %v291, %v289
      %v312 = vpack.c.b16 %v292, %v290
      %v313 = vpack.c.b16 %v295, %v293
      %v314 = vpack.c.b16 %v296, %v294
      %v315 = vpack.c.b16 %v299, %v297
      %v316 = vpack.c.b16 %v300, %v298
      %v344 = vunpack.c.l.b16 %v234
      %v345 = vunpack.c.l.b16 %v235
      %v346 = vunpack.c.l.b16 %v236
      %v347 = vunpack.c.l.b16 %v237
      %v348 = vunpack.c.l.b16 %v238
      %v349 = vunpack.c.l.b16 %v239
      %v350 = vunpack.c.l.b16 %v240
      %v351 = vunpack.c.l.b16 %v241
      %v352 = vunpack.c.l.b16 %v242
      %v353 = vunpack.c.l.b16 %v243
      %v354 = vunpack.c.l.b16 %v244
      %v355 = vunpack.c.l.b16 %v245
      %v356 = vunpack.c.l.b16 %v246
      %v357 = vunpack.c.l.b16 %v247
      %v358 = vunpack.c.l.b16 %v248
      %v359 = vunpack.c.l.b16 %v249
      %v360 = vunpack.c.l.b16 %v250
      %v361 = vunpack.c.l.b16 %v251
      %v362 = vunpack.c.l.b16 %v252
      %v363 = vpack.c.b16 %v345, %v344
      %v364 = vpack.c.b16 %v347, %v346
      %v365 = vpack.c.b16 %v349, %v348
      %v366 = vpack.c.b16 %v351, %v350
      %v367 = vpack.c.b16 %v353, %v352
      %v368 = vpack.c.b16 %v355, %v354
      %v369 = vpack.c.b16 %v357, %v356
      %v370 = vpack.c.b16 %v359, %v358
      %v371 = vpack.c.b16 %v361, %v360
      %v372 = vpack.c.b16 %v362, %v362
      %vm382 = vcmask 154624
      %v384 = vsel %vm382, %v302, 0
      %v387 = vsel %vm382, %v304, 0
      %v390 = vsel %vm382, %v306, 0
      %v393 = vsel %vm382, %v308, 0
      %v396 = vsel %vm382, %v310, 0
      %v399 = vsel %vm382, %v312, 0
      %v402 = vsel %vm382, %v314, 0
      %v405 = vsel %vm382, %v316, 0
      %vm407 = vcmask 1040384
      %vm408 = vcmask 1041408
      %v409 = vsel %vm407, 4294967295, 65535
      %v410 = vsel %vm408, %v409, 0
      %v412 = vand.u32 %v372, %v410
      %414 = vmatprep.subr.bf16.mxu0 0
      %415 = vmatpush1.bf16.msra.mxu0 %v370
      %416 = vmatprep.subr.bf16.mxu0 0
      %417 = vmatpush1.bf16.msra.mxu0 %v369
      %418 = vmatprep.subr.bf16.mxu0 0
      %419 = vmatpush1.bf16.msra.mxu0 %v368
      %420 = vmatprep.subr.bf16.mxu0 0
      %421 = vmatpush1.bf16.msra.mxu0 %v367
      %422 = vmatprep.subr.bf16.mxu0 0
      %423 = vmatpush1.bf16.msra.mxu0 %v366
      %424 = vmatprep.subr.bf16.mxu0 0
      %425 = vmatpush1.bf16.msra.mxu0 %v365
      %426 = vmatprep.subr.bf16.mxu0 0
      %427 = vmatpush1.bf16.msra.mxu0 %v364
      %428 = vmatprep.subr.bf16.mxu0 0
      %429 = vmatpush1.bf16.msra.mxu0 %v363
      %430 = vmatprep.subr.bf16.mxu0 0
      %431 = vmatpush2.bf16.msra.mxu0 0
      %432 = vmatprep.subr.bf16.mxu0 0
      %433 = vmatpush2.bf16.msra.mxu0 0
      %434 = vmatprep.subr.bf16.mxu0 0
      %435 = vmatpush2.bf16.msra.mxu0 0
      %436 = vmatprep.subr.bf16.mxu0 0
      %437 = vmatpush2.bf16.msra.mxu0 0
      %438 = vmatprep.subr.bf16.mxu0 0
      %439 = vmatpush2.bf16.msra.mxu0 0
      %440 = vmatprep.subr.bf16.mxu0 0
      %441 = vmatpush2.bf16.msra.mxu0 0
      %442 = vmatprep.subr.bf16.mxu0 0
      %443 = vmatpush2.bf16.msra.mxu0 %v412
      %444 = vmatprep.subr.bf16.mxu0 0
      %445 = vmatpush2.bf16.msra.mxu0 %v371
      %446 = vmatprep.mubr.bf16.mxu0 %v384
      %447 = vmatmul.mubr.bf16.gmra.mxu0 %v301
      %v448 = vpop.f32.mrf.mxu0
      %v449 = vadd.f32 0.0, %v448
      %v450 = vpop.f32.mrf.mxu0
      %v451 = vpop.f32.mrf.mxu0
      %v452 = vadd.f32 0.0, %v451
      %v453 = vpop.f32.mrf.mxu0
      %454 = vmatprep.mubr.bf16.mxu0 %v387
      %455 = vmatmul.mubr.bf16.gmra.mxu0 %v303
      %v456 = vpop.f32.mrf.mxu0
      %v457 = vadd.f32 0.0, %v456
      %v458 = vpop.f32.mrf.mxu0
      %v459 = vpop.f32.mrf.mxu0
      %v460 = vadd.f32 0.0, %v459
      %v461 = vpop.f32.mrf.mxu0
      %462 = vmatprep.mubr.bf16.mxu0 %v390
      %463 = vmatmul.mubr.bf16.gmra.mxu0 %v305
      %v464 = vpop.f32.mrf.mxu0
      %v465 = vadd.f32 0.0, %v464
      %v466 = vpop.f32.mrf.mxu0
      %v467 = vpop.f32.mrf.mxu0
      %v468 = vadd.f32 0.0, %v467
      %v469 = vpop.f32.mrf.mxu0
      %470 = vmatprep.mubr.bf16.mxu0 %v393
      %471 = vmatmul.mubr.bf16.gmra.mxu0 %v307
      %v472 = vpop.f32.mrf.mxu0
      %v473 = vadd.f32 0.0, %v472
      %v474 = vpop.f32.mrf.mxu0
      %v475 = vpop.f32.mrf.mxu0
      %v476 = vadd.f32 0.0, %v475
      %v477 = vpop.f32.mrf.mxu0
      %478 = vmatprep.mubr.bf16.mxu0 %v396
      %479 = vmatmul.mubr.bf16.gmra.mxu0 %v309
      %v480 = vpop.f32.mrf.mxu0
      %v481 = vadd.f32 0.0, %v480
      %v482 = vpop.f32.mrf.mxu0
      %v483 = vpop.f32.mrf.mxu0
      %v484 = vadd.f32 0.0, %v483
      %v485 = vpop.f32.mrf.mxu0
      %486 = vmatprep.mubr.bf16.mxu0 %v399
      %487 = vmatmul.mubr.bf16.gmra.mxu0 %v311
      %v488 = vpop.f32.mrf.mxu0
      %v489 = vadd.f32 0.0, %v488
      %v490 = vpop.f32.mrf.mxu0
      %v491 = vpop.f32.mrf.mxu0
      %v492 = vadd.f32 0.0, %v491
      %v493 = vpop.f32.mrf.mxu0
      %494 = vmatprep.mubr.bf16.mxu0 %v402
      %495 = vmatmul.mubr.bf16.gmra.mxu0 %v313
      %v496 = vpop.f32.mrf.mxu0
      %v497 = vadd.f32 0.0, %v496
      %v498 = vpop.f32.mrf.mxu0
      %v499 = vpop.f32.mrf.mxu0
      %v500 = vadd.f32 0.0, %v499
      %v501 = vpop.f32.mrf.mxu0
      %502 = vmatprep.mubr.bf16.mxu0 %v405
      %503 = vmatmul.mubr.bf16.gmra.mxu0 %v315
      %v504 = vpop.f32.mrf.mxu0
      %v505 = vadd.f32 0.0, %v504
      %v506 = vpop.f32.mrf.mxu0
      %v507 = vpop.f32.mrf.mxu0
      %v508 = vadd.f32 0.0, %v507
      %v509 = vpop.f32.mrf.mxu0
      %510 = vdwg.mxu0
      %v511 = vld [vmem:[%s206] sm:$0xff]
      %v512 = vadd.f32 %v449, %v452
      %v513 = vadd.f32 %v512, %v457
      %v514 = vadd.f32 %v513, %v460
      %v515 = vadd.f32 %v514, %v465
      %v516 = vadd.f32 %v515, %v468
      %v517 = vadd.f32 %v516, %v473
      %v518 = vadd.f32 %v517, %v476
      %v519 = vadd.f32 %v518, %v481
      %v520 = vadd.f32 %v519, %v484
      %v521 = vadd.f32 %v520, %v489
      %v522 = vadd.f32 %v521, %v492
      %v523 = vadd.f32 %v522, %v497
      %v524 = vadd.f32 %v523, %v500
      %v525 = vadd.f32 %v524, %v505
      %v526 = vadd.f32 %v525, %v508
      %v527 = vadd.f32 %v511, %v526
      %528 = vst [vmem:[%s206] sm:$0xff] %v527
      %v529 = vld [vmem:[%s210] sm:$0xff]
      %v530 = vmul.f32 %v449, %v449
      %v531 = vmul.f32 %v452, %v452
      %v532 = vmul.f32 %v457, %v457
      %v533 = vmul.f32 %v460, %v460
      %v534 = vmul.f32 %v465, %v465
      %v535 = vmul.f32 %v468, %v468
      %v536 = vmul.f32 %v473, %v473
      %v537 = vmul.f32 %v476, %v476
      %v538 = vmul.f32 %v481, %v481
      %v539 = vmul.f32 %v484, %v484
      %v540 = vmul.f32 %v489, %v489
      %v541 = vmul.f32 %v492, %v492
      %v542 = vmul.f32 %v497, %v497
      %v543 = vmul.f32 %v500, %v500
      %v544 = vmul.f32 %v505, %v505
      %v545 = vmul.f32 %v508, %v508
      %v546 = vadd.f32 %v530, %v531
      %v547 = vadd.f32 %v546, %v532
      %v548 = vadd.f32 %v547, %v533
      %v549 = vadd.f32 %v548, %v534
      %v550 = vadd.f32 %v549, %v535
      %v551 = vadd.f32 %v550, %v536
      %v552 = vadd.f32 %v551, %v537
      %v553 = vadd.f32 %v552, %v538
      %v554 = vadd.f32 %v553, %v539
      %v555 = vadd.f32 %v554, %v540
      %v556 = vadd.f32 %v555, %v541
      %v557 = vadd.f32 %v556, %v542
      %v558 = vadd.f32 %v557, %v543
      %v559 = vadd.f32 %v558, %v544
      %v560 = vadd.f32 %v559, %v545
      %v561 = vadd.f32 %v529, %v560
      %562 = vst [vmem:[%s210] sm:$0xff] %v561
      %p563 = scmp.lt.s32.totalorder %s19, 1
      %s564 = scalar_select %p563, %s19, 1
      %s565 = smul.addr %s564, 8
      %s566 = scalar_lea.vmem %s2, %s565
      %p567 = scmp.lt.s32.totalorder %s19, 1
      %s568 = scalar_select %p567, %s19, 1
      %s569 = smul.addr %s568, 8
      %s570 = scalar_lea.vmem %s3, %s569
      // Predicated region
      $region33: #{resnet_basic_stem.2} parent=27 // pred_check
        %p571 = pneg %p96
      $region34: #{resnet_basic_stem.2} parent=27 // pred_check_branch
        %573 = sbr.rel (%p571) target = $region36
      $region35: #{resnet_basic_stem.2} parent=27 // pred_region
        _
      $region36: #{resnet_basic_stem.2} parent=27 // pred_fallthru
        _
      // Predicated region
      $region37: #{resnet_basic_stem.2} parent=27 // pred_check
        %p574 = pneg %p122
      $region38: #{resnet_basic_stem.2} parent=27 // pred_check_branch
        %576 = sbr.rel (%p574) target = $region40
      $region39: #{resnet_basic_stem.2} parent=27 // pred_region
        _
      $region40: #{resnet_basic_stem.2} parent=27 // pred_fallthru
        _
    $region28: #{resnet_basic_stem.2} parent=5 // pred_fallthru
      _
    %p577 = scmp.le.s32.totalorder 2, %s10
    // Predicated region
    $region41: #{resnet_basic_stem.2} parent=5 // pred_check
      %p578 = pneg %p577
    $region42: #{resnet_basic_stem.2} parent=5 // pred_check_branch
      %580 = sbr.rel (%p578) target = $region44
    $region43: #{resnet_basic_stem.2} parent=5 // pred_region
      %s581 = ssub.s32 %s10, 2
      // Predicated region
      $region45: #{resnet_basic_stem.2} parent=43 // pred_check
        %p582 = pneg %p102
      $region46: #{resnet_basic_stem.2} parent=43 // pred_check_branch
        %584 = sbr.rel (%p582) target = $region48
      $region47: #{resnet_basic_stem.2} parent=43 // pred_region
        %p585 = scmp.lt.s32.totalorder %s21, 1
        %s586 = scalar_select %p585, %s21, 1
        %s587 = smul.addr %s586, 8
        %s588 = scalar_lea.vmem %s2, %s587
      $region48: #{resnet_basic_stem.2} parent=43 // pred_fallthru
        _
      // Predicated region
      $region49: #{resnet_basic_stem.2} parent=43 // pred_check
        %p589 = pneg %p128
      $region50: #{resnet_basic_stem.2} parent=43 // pred_check_branch
        %591 = sbr.rel (%p589) target = $region52
      $region51: #{resnet_basic_stem.2} parent=43 // pred_region
        %p592 = scmp.lt.s32.totalorder %s21, 1
        %s593 = scalar_select %p592, %s21, 1
        %s594 = smul.addr %s593, 8
        %s595 = scalar_lea.vmem %s3, %s594
      $region52: #{resnet_basic_stem.2} parent=43 // pred_fallthru
        _
    $region44: #{resnet_basic_stem.2} parent=5 // pred_fallthru
      _
  $region6: #{resnet_basic_stem.2} parent=0 // loop_footer
    %s14 = sadd.s32 1, %s10
  $region7: #{resnet_basic_stem.2} parent=0 // loop_footer_branch
    %9 = sbr.rel target = $region3
  $region8: #{resnet_basic_stem.2} parent=0 // loop_exit
    _

// kernel: resnet_basic_stem.3
$region0: #{resnet_basic_stem.3}
  #allocation0 [shape = 'u32[]', space=smem, size = 0x4, offset = 0x4, fixed_abs, tag = 'smem constant byte address 0x4 - core index']
  #allocation1 [shape = 'u32[144,128]{1,0:T(1,128)}', space=vmem, size = 0x12000, scoped, tag = 'internal scratch']
  #allocation2 [shape = 'f32[10,10,128]{2,1,0:T(8,128)}', space=vmem, size = 0x14000, scoped, tag = 'scratch operand']
  %s0 = inlined_call_operand.vmem [shape: bf16[8,64,147], index: 0, kind: input, shape index: {}]
  %s1 = inlined_call_operand.vmem [shape: bf16[147,128], index: 1, kind: input, shape index: {}]
  %s2 = inlined_call_operand.vmem [shape: f32[1,128], index: 2, kind: input, shape index: {}]
  %s3 = inlined_call_operand.vmem [shape: f32[1,128], index: 3, kind: input, shape index: {}]
  %s4 = inlined_call_operand.vmem [shape: bf16[8,4,4,128], index: 4, kind: output, shape index: {}]
  %s5 = sld [smem:[#allocation0]]
  $region49: #{resnet_basic_stem.3} parent=0
    _
  %s7 = ssub.s32 1, %s5
  %s8 = scalar_select 0, %s7, %s5
  loop: start=0, step=1, limit=10
  $region2: #{resnet_basic_stem.3} parent=0 // loop_pre_header
    _
  $region3: #{resnet_basic_stem.3} parent=0 // loop_header
    %s10 = sphi 0, %s14
    %p11 = scmp.ge.s32.totalorder %s10, 10
    %s20 = sphi 0, %s22
    %s23 = sphi 0, %s20
    %s24 = sphi 0, %s23
    %s40 = sphi 0, %s24
    %s44 = sphi 0, %s44
    %s46 = sphi 0, %s44
    %s47 = sphi 0, %s46
    %s61 = sphi 0, %s47
    %s65 = sphi 0, %s65
    %s67 = sphi 0, %s65
    %s68 = sphi 0, %s67
    %s82 = sphi 0, %s68
    %s86 = sphi 0, %s86
    %s88 = sphi 0, %s86
    %s89 = sphi 0, %s88
    %s103 = sphi 0, %s89
    %s109 = sphi 0, %s111
    %s112 = sphi 0, %s109
    %s113 = sphi 0, %s112
    %s129 = sphi 0, %s113
  $region4: #{resnet_basic_stem.3} parent=0 // loop_header_branch
    %13 = sbr.rel (%p11) target = $region8
  $region5: #{resnet_basic_stem.3} parent=0 // loop_body
    %s15 = ssub.s32 %s10, 1
    %s16 = ssub.s32 %s10, 2
    %s17 = sadd.s32 %s10, 1
    %s18 = ssub.s32 %s10, %s17
    %p19 = scmp.eq.s32.totalorder %s18, 0
    %s21 = sadd.s32 %s20, 1
    %s22 = scalar_select %p19, %s20, %s21
    %p25 = pneg %p19
    %p26 = scmp.eq.s32.totalorder %s10, 7
    %p27 = por %p25, %p26
    %p28 = scmp.ne.s32.totalorder %s20, %s23
    %p29 = scmp.eq.s32.totalorder %s10, 0
    %p30 = por %p28, %p29
    %p31 = scmp.ne.s32.totalorder %s20, %s23
    %p32 = scmp.eq.s32.totalorder %s15, 7
    %p33 = por %p31, %p32
    %p34 = scmp.ne.s32.totalorder %s23, %s24
    %p35 = scmp.eq.s32.totalorder %s15, 0
    %p36 = por %p34, %p35
    %p37 = scmp.ne.s32.totalorder %s23, %s24
    %p38 = scmp.eq.s32.totalorder %s16, 7
    %p39 = por %p37, %p38
    %p41 = scmp.ne.s32.totalorder %s24, %s40
    %p42 = scmp.eq.s32.totalorder %s16, 0
    %p43 = por %p41, %p42
    %s45 = sadd.s32 %s44, 1
    %p48 = scmp.eq.s32.totalorder %s10, 7
    %p49 = scmp.ne.s32.totalorder %s44, %s46
    %p50 = scmp.eq.s32.totalorder %s10, 0
    %p51 = por %p49, %p50
    %p52 = scmp.ne.s32.totalorder %s44, %s46
    %p53 = scmp.eq.s32.totalorder %s15, 7
    %p54 = por %p52, %p53
    %p55 = scmp.ne.s32.totalorder %s46, %s47
    %p56 = scmp.eq.s32.totalorder %s15, 0
    %p57 = por %p55, %p56
    %p58 = scmp.ne.s32.totalorder %s46, %s47
    %p59 = scmp.eq.s32.totalorder %s16, 7
    %p60 = por %p58, %p59
    %p62 = scmp.ne.s32.totalorder %s47, %s61
    %p63 = scmp.eq.s32.totalorder %s16, 0
    %p64 = por %p62, %p63
    %s66 = sadd.s32 %s65, 1
    %p69 = scmp.eq.s32.totalorder %s10, 7
    %p70 = scmp.ne.s32.totalorder %s65, %s67
    %p71 = scmp.eq.s32.totalorder %s10, 0
    %p72 = por %p70, %p71
    %p73 = scmp.ne.s32.totalorder %s65, %s67
    %p74 = scmp.eq.s32.totalorder %s15, 7
    %p75 = por %p73, %p74
    %p76 = scmp.ne.s32.totalorder %s67, %s68
    %p77 = scmp.eq.s32.totalorder %s15, 0
    %p78 = por %p76, %p77
    %p79 = scmp.ne.s32.totalorder %s67, %s68
    %p80 = scmp.eq.s32.totalorder %s16, 7
    %p81 = por %p79, %p80
    %p83 = scmp.ne.s32.totalorder %s68, %s82
    %p84 = scmp.eq.s32.totalorder %s16, 0
    %p85 = por %p83, %p84
    %s87 = sadd.s32 %s86, 1
    %p90 = scmp.eq.s32.totalorder %s10, 7
    %p91 = scmp.ne.s32.totalorder %s86, %s88
    %p92 = scmp.eq.s32.totalorder %s10, 0
    %p93 = por %p91, %p92
    %p94 = scmp.ne.s32.totalorder %s86, %s88
    %p95 = scmp.eq.s32.totalorder %s15, 7
    %p96 = por %p94, %p95
    %p97 = scmp.ne.s32.totalorder %s88, %s89
    %p98 = scmp.eq.s32.totalorder %s15, 0
    %p99 = por %p97, %p98
    %p100 = scmp.ne.s32.totalorder %s88, %s89
    %p101 = scmp.eq.s32.totalorder %s16, 7
    %p102 = por %p100, %p101
    %p104 = scmp.ne.s32.totalorder %s89, %s103
    %p105 = scmp.eq.s32.totalorder %s16, 0
    %p106 = por %p104, %p105
    %s107 = ssub.s32 %s10, %s17
    %p108 = scmp.eq.s32.totalorder %s107, 0
    %s110 = sadd.s32 %s109, 1
    %s111 = scalar_select %p108, %s109, %s110
    %p114 = pneg %p108
    %p115 = scmp.eq.s32.totalorder %s10, 7
    %p116 = por %p114, %p115
    %p117 = scmp.ne.s32.totalorder %s109, %s112
    %p118 = scmp.eq.s32.totalorder %s10, 0
    %p119 = por %p117, %p118
    %p120 = scmp.ne.s32.totalorder %s109, %s112
    %p121 = scmp.eq.s32.totalorder %s15, 7
    %p122 = por %p120, %p121
    %p123 = scmp.ne.s32.totalorder %s112, %s113
    %p124 = scmp.eq.s32.totalorder %s15, 0
    %p125 = por %p123, %p124
    %p126 = scmp.ne.s32.totalorder %s112, %s113
    %p127 = scmp.eq.s32.totalorder %s16, 7
    %p128 = por %p126, %p127
    %p130 = scmp.ne.s32.totalorder %s113, %s129
    %p131 = scmp.eq.s32.totalorder %s16, 0
    %p132 = por %p130, %p131
    %p133 = scmp.le.s32.totalorder 1, %s10
    %p134 = scmp.lt.s32.totalorder %s10, 9
    %p135 = pnand %p133, %p134
    %p136 = pneg %p135
    // Predicated region
    $region9: #{resnet_basic_stem.3} parent=5 // pred_check
      _
    $region10: #{resnet_basic_stem.3} parent=5 // pred_check_branch
      %138 = sbr.rel (%p135) target = $region12
    $region11: #{resnet_basic_stem.3} parent=5 // pred_region
      %s139 = ssub.s32 %s10, 1
      // Predicated region
      $region13: #{resnet_basic_stem.3} parent=11 // pred_check
        %p140 = pneg %p57
      $region14: #{resnet_basic_stem.3} parent=11 // pred_check_branch
        %142 = sbr.rel (%p140) target = $region16
      $region15: #{resnet_basic_stem.3} parent=11 // pred_region
        _
      $region16: #{resnet_basic_stem.3} parent=11 // pred_fallthru
        _
      // Predicated region
      $region17: #{resnet_basic_stem.3} parent=11 // pred_check
        %p143 = pneg %p78
      $region18: #{resnet_basic_stem.3} parent=11 // pred_check_branch
        %145 = sbr.rel (%p143) target = $region20
      $region19: #{resnet_basic_stem.3} parent=11 // pred_region
        _
      $region20: #{resnet_basic_stem.3} parent=11 // pred_fallthru
        _
      // Predicated region
      $region21: #{resnet_basic_stem.3} parent=11 // pred_check
        %p146 = pneg %p99
      $region22: #{resnet_basic_stem.3} parent=11 // pred_check_branch
        %148 = sbr.rel (%p146) target = $region24
      $region23: #{resnet_basic_stem.3} parent=11 // pred_region
        _
      $region24: #{resnet_basic_stem.3} parent=11 // pred_fallthru
        _
    $region12: #{resnet_basic_stem.3} parent=5 // pred_fallthru
      _
    %p149 = scmp.lt.s32.totalorder %s10, 8
    // Predicated region
    $region25: #{resnet_basic_stem.3} parent=5 // pred_check
      %p150 = pneg %p149
    $region26: #{resnet_basic_stem.3} parent=5 // pred_check_branch
      %152 = sbr.rel (%p150) target = $region28
    $region27: #{resnet_basic_stem.3} parent=5 // pred_region
      // Predicated region
      $region29: #{resnet_basic_stem.3} parent=27 // pred_check
        %p153 = pneg %p30
      $region30: #{resnet_basic_stem.3} parent=27 // pred_check_branch
        %155 = sbr.rel (%p153) target = $region32
      $region31: #{resnet_basic_stem.3} parent=27 // pred_region
        %p156 = scmp.lt.s32.totalorder %s10, 7
        %s157 = scalar_select %p156, %s10, 7
        %s158 = smul.addr %s157, 16
        %s159 = smul.addr %s158, 4
        %s160 = scalar_lea.vmem %s0, %s159
      $region32: #{resnet_basic_stem.3} parent=27 // pred_fallthru
        _
    $region28: #{resnet_basic_stem.3} parent=5 // pred_fallthru
      _
    %p161 = scmp.le.s32.totalorder 1, %s10
    %p162 = scmp.lt.s32.totalorder %s10, 9
    %p163 = pnand %p161, %p162
    %p164 = pneg %p163
    // Predicated region
    $region33: #{resnet_basic_stem.3} parent=5 // pred_check
      _
    $region34: #{resnet_basic_stem.3} parent=5 // pred_check_branch
      %166 = sbr.rel (%p163) target = $region36
    $region35: #{resnet_basic_stem.3} parent=5 // pred_region
      %s167 = ssub.s32 %s10, 1
      %p168 = scmp.lt.s32.totalorder %s15, 7
      %s169 = scalar_select %p168, %s15, 7
      %s170 = smul.addr %s169, 16
      %s171 = smul.addr %s170, 4
      %s172 = scalar_lea.vmem %s0, %s171
      %p173 = pneg %p36
      %p174 = pneg %p33
      %p175 = pneg %p57
      %p176 = pneg %p54
      %p177 = pneg %p78
      %p178 = pneg %p75
      %p179 = pneg %p99
      %p180 = pneg %p96
      %p181 = pneg %p125
      %p182 = pneg %p122
      %p183 = scmp.lt.s32.totalorder %s15, 7
      %s184 = scalar_select %p183, %s15, 7
      %s185 = smul.addr %s184, 4
      %s186 = smul.addr %s185, 2
      %s187 = scalar_lea.vmem %s4, %s186
      %p188 = scmp.lt.s32.totalorder %s15, 7
      %s189 = scalar_select %p188, %s15, 7
      %s190 = smul.addr %s189, 16
      %s191 = smul.addr %s190, 4
      %s192 = scalar_lea.vmem %s0, %s191
      %p193 = scmp.lt.s32.totalorder %s15, 7
      %s194 = scalar_select %p193, %s15, 7
      %s195 = smul.addr %s194, 4
      %s196 = smul.addr %s195, 2
      %s197 = scalar_lea.vmem %s4, %s196
      %v199 = vld [vmem:[%s192] sm:$0xff]
      %v200 = vld [vmem:[%s192 + $0x8] sm:$0xff]
      %v201 = vld [vmem:[%s192 + $0x10] sm:$0xff]
      %v202 = vld [vmem:[%s192 + $0x18] sm:$0xff]
      %v203 = vld [vmem:[%s192 + $0x20] sm:$0xff]
      %v204 = vld [vmem:[%s192 + $0x28] sm:$0xff]
      %v205 = vld [vmem:[%s192 + $0x30] sm:$0xff]
      %v206 = vld [vmem:[%s192 + $0x38] sm:$0xff]
      %v207 = vld [vmem:[%s1] sm:$0xf]
      %v208 = vld [vmem:[%s1 + $0x4] sm:$0xf]
      %v209 = vld [vmem:[%s1 + $0x8] sm:$0xf]
      %v210 = vld [vmem:[%s1 + $0xc] sm:$0xf]
      %v211 = vld [vmem:[%s1 + $0x10] sm:$0xf]
      %v212 = vld [vmem:[%s1 + $0x14] sm:$0xf]
      %v213 = vld [vmem:[%s1 + $0x18] sm:$0xf]
      %v214 = vld [vmem:[%s1 + $0x1c] sm:$0xf]
      %v215 = vld [vmem:[%s1 + $0x20] sm:$0xf]
      %v216 = vld [vmem:[%s1 + $0x24] sm:$0xf]
      %v217 = vld [vmem:[%s1 + $0x28] sm:$0xf]
      %v218 = vld [vmem:[%s1 + $0x2c] sm:$0xf]
      %v219 = vld [vmem:[%s1 + $0x30] sm:$0xf]
      %v220 = vld [vmem:[%s1 + $0x34] sm:$0xf]
      %v221 = vld [vmem:[%s1 + $0x38] sm:$0xf]
      %v222 = vld [vmem:[%s1 + $0x3c] sm:$0xf]
      %v223 = vld [vmem:[%s1 + $0x40] sm:$0xf]
      %v224 = vld [vmem:[%s1 + $0x44] sm:$0xf]
      %v225 = vld [vmem:[%s1 + $0x48] sm:$0x3]
      %v234 = vunpack.c.l.b16 %v199
      %v235 = vunpack.c.h.b16 %v199
      %v236 = vunpack.c.l.b16 %v200
      %v237 = vunpack.c.h.b16 %v200
      %v238 = vunpack.c.l.b16 %v201
      %v239 = vunpack.c.h.b16 %v201
      %v240 = vunpack.c.l.b16 %v202
      %v241 = vunpack.c.h.b16 %v202
      %v242 = vunpack.c.l.b16 %v203
      %v243 = vunpack.c.h.b16 %v203
      %v244 = vunpack.c.l.b16 %v204
      %v245 = vunpack.c.h.b16 %v204
      %v246 = vunpack.c.l.b16 %v205
      %v247 = vunpack.c.h.b16 %v205
      %v248 = vunpack.c.l.b16 %v206
      %v249 = vunpack.c.h.b16 %v206
      %v250 = vpack.c.b16 %v236, %v234
      %v251 = vpack.c.b16 %v237, %v235
      %v252 = vpack.c.b16 %v240, %v238
      %v253 = vpack.c.b16 %v241, %v239
      %v254 = vpack.c.b16 %v244, %v242
      %v255 = vpack.c.b16 %v245, %v243
      %v256 = vpack.c.b16 %v248, %v246
      %v257 = vpack.c.b16 %v249, %v247
      %v281 = vunpack.c.l.b16 %v207
      %v282 = vunpack.c.l.b16 %v208
      %v283 = vunpack.c.l.b16 %v209
      %v284 = vunpack.c.l.b16 %v210
      %v285 = vunpack.c.l.b16 %v211
      %v286 = vunpack.c.l.b16 %v212
      %v287 = vunpack.c.l.b16 %v213
      %v288 = vunpack.c.l.b16 %v214
      %v289 = vunpack.c.l.b16 %v215
      %v290 = vunpack.c.l.b16 %v216
      %v291 = vunpack.c.l.b16 %v217
      %v292 = vunpack.c.l.b16 %v218
      %v293 = vunpack.c.l.b16 %v219
      %v294 = vunpack.c.l.b16 %v220
      %v295 = vunpack.c.l.b16 %v221
      %v296 = vunpack.c.l.b16 %v222
      %v297 = vunpack.c.l.b16 %v223
      %v298 = vunpack.c.l.b16 %v224
      %v299 = vunpack.c.l.b16 %v225
      %v300 = vpack.c.b16 %v282, %v281
      %v301 = vpack.c.b16 %v284, %v283
      %v302 = vpack.c.b16 %v286, %v285
      %v303 = vpack.c.b16 %v288, %v287
      %v304 = vpack.c.b16 %v290, %v289
      %v305 = vpack.c.b16 %v292, %v291
      %v306 = vpack.c.b16 %v294, %v293
      %v307 = vpack.c.b16 %v296, %v295
      %v308 = vpack.c.b16 %v298, %v297
      %v309 = vpack.c.b16 %v299, %v299
      %vm319 = vcmask 154624
      %v321 = vsel %vm319, %v251, 0
      %v324 = vsel %vm319, %v253, 0
      %v327 = vsel %vm319, %v255, 0
      %v330 = vsel %vm319, %v257, 0
      %vm332 = vcmask 1040384
      %vm333 = vcmask 1041408
      %v334 = vsel %vm332, 4294967295, 65535
      %v335 = vsel %vm333, %v334, 0
      %v337 = vand.u32 %v309, %v335
      %339 = vmatprep.subr.bf16.mxu0 0
      %340 = vmatpush1.bf16.msra.mxu0 %v307
      %341 = vmatprep.subr.bf16.mxu0 0
      %342 = vmatpush1.bf16.msra.mxu0 %v306
      %343 = vmatprep.subr.bf16.mxu0 0
      %344 = vmatpush1.bf16.msra.mxu0 %v305
      %345 = vmatprep.subr.bf16.mxu0 0
      %346 = vmatpush1.bf16.msra.mxu0 %v304
      %347 = vmatprep.subr.bf16.mxu0 0
      %348 = vmatpush1.bf16.msra.mxu0 %v303
      %349 = vmatprep.subr.bf16.mxu0 0
      %350 = vmatpush1.bf16.msra.mxu0 %v302
      %351 = vmatprep.subr.bf16.mxu0 0
      %352 = vmatpush1.bf16.msra.mxu0 %v301
      %353 = vmatprep.subr.bf16.mxu0 0
      %354 = vmatpush1.bf16.msra.mxu0 %v300
      %355 = vmatprep.subr.bf16.mxu0 0
      %356 = vmatpush2.bf16.msra.mxu0 0
      %357 = vmatprep.subr.bf16.mxu0 0
      %358 = vmatpush2.bf16.msra.mxu0 0
      %359 = vmatprep.subr.bf16.mxu0 0
      %360 = vmatpush2.bf16.msra.mxu0 0
      %361 = vmatprep.subr.bf16.mxu0 0
      %362 = vmatpush2.bf16.msra.mxu0 0
      %363 = vmatprep.subr.bf16.mxu0 0
      %364 = vmatpush2.bf16.msra.mxu0 0
      %365 = vmatprep.subr.bf16.mxu0 0
      %366 = vmatpush2.bf16.msra.mxu0 0
      %367 = vmatprep.subr.bf16.mxu0 0
      %368 = vmatpush2.bf16.msra.mxu0 %v337
      %369 = vmatprep.subr.bf16.mxu0 0
      %370 = vmatpush2.bf16.msra.mxu0 %v308
      %371 = vmatprep.mubr.bf16.mxu0 %v321
      %372 = vmatmul.mubr.bf16.gmra.mxu0 %v250
      %v373 = vpop.f32.mrf.mxu0
      %v374 = vadd.f32 0.0, %v373
      %v375 = vpop.f32.mrf.mxu0
      %v376 = vpop.f32.mrf.mxu0
      %v377 = vadd.f32 0.0, %v376
      %v378 = vpop.f32.mrf.mxu0
      %379 = vmatprep.mubr.bf16.mxu0 %v324
      %380 = vmatmul.mubr.bf16.gmra.mxu0 %v252
      %v381 = vpop.f32.mrf.mxu0
      %v382 = vadd.f32 0.0, %v381
      %v383 = vpop.f32.mrf.mxu0
      %v384 = vpop.f32.mrf.mxu0
      %v385 = vadd.f32 0.0, %v384
      %v386 = vpop.f32.mrf.mxu0
      %387 = vmatprep.mubr.bf16.mxu0 %v327
      %388 = vmatmul.mubr.bf16.gmra.mxu0 %v254
      %v389 = vpop.f32.mrf.mxu0
      %v390 = vadd.f32 0.0, %v389
      %v391 = vpop.f32.mrf.mxu0
      %v392 = vpop.f32.mrf.mxu0
      %v393 = vadd.f32 0.0, %v392
      %v394 = vpop.f32.mrf.mxu0
      %395 = vmatprep.mubr.bf16.mxu0 %v330
      %396 = vmatmul.mubr.bf16.gmra.mxu0 %v256
      %v397 = vpop.f32.mrf.mxu0
      %v398 = vadd.f32 0.0, %v397
      %v399 = vpop.f32.mrf.mxu0
      %v400 = vpop.f32.mrf.mxu0
      %v401 = vadd.f32 0.0, %v400
      %v402 = vpop.f32.mrf.mxu0
      %403 = vdwg.mxu0
      %v404 = vld [vmem:[%s2] sm:$0x1]
      %v406 = vlaneseq
      %v407 = vshrl.u32 %v406, 7
      %v408 = vsub.s32 0, %v407
      %v409 = vrot.slane %v404, %v408
      %v411 = vmul.f32 %v374, %v409
      %v412 = vmul.f32 %v377, %v409
      %v413 = vmul.f32 %v382, %v409
      %v414 = vmul.f32 %v385, %v409
      %v415 = vmul.f32 %v390, %v409
      %v416 = vmul.f32 %v393, %v409
      %v417 = vmul.f32 %v398, %v409
      %v418 = vmul.f32 %v401, %v409
      %v419 = vld [vmem:[%s3] sm:$0x1]
      %v421 = vlaneseq
      %v422 = vshrl.u32 %v421, 7
      %v423 = vsub.s32 0, %v422
      %v424 = vrot.slane %v419, %v423
      %v426 = vadd.f32 %v411, %v424
      %v427 = vadd.f32 %v412, %v424
      %v428 = vadd.f32 %v413, %v424
      %v429 = vadd.f32 %v414, %v424
      %v430 = vadd.f32 %v415, %v424
      %v431 = vadd.f32 %v416, %v424
      %v432 = vadd.f32 %v417, %v424
      %v433 = vadd.f32 %v418, %v424
      %v434 = vmax.f32 %v426, 0.0
      %v435 = vmax.f32 %v427, 0.0
      %v436 = vmax.f32 %v428, 0.0
      %v437 = vmax.f32 %v429, 0.0
      %v438 = vmax.f32 %v430, 0.0
      %v439 = vmax.f32 %v431, 0.0
      %v440 = vmax.f32 %v432, 0.0
      %v441 = vmax.f32 %v433, 0.0
      %442 = vst [vmem:[#allocation2] sm:$0xff] 0.0
      %443 = vst [vmem:[#allocation2 + $0x8] sm:$0x3] 0.0
      %s444 = scalar_lea.vmem [#allocation2], 144
      %445 = vst [vmem:[%s444] sm:$0xff] 0.0
      %446 = vst [vmem:[%s444 + $0x8] sm:$0x3] 0.0
      %447 = vst [vmem:[#allocation2] sm:$0x1] 0.0
      %448 = vst [vmem:[#allocation2 + $0x10] sm:$0x1] 0.0
      %449 = vst [vmem:[#allocation2 + $0x20] sm:$0x1] 0.0
      %450 = vst [vmem:[#allocation2 + $0x30] sm:$0x1] 0.0
      %451 = vst [vmem:[#allocation2 + $0x40] sm:$0x1] 0.0
      %452 = vst [vmem:[#allocation2 + $0x50] sm:$0x1] 0.0
      %453 = vst [vmem:[#allocation2 + $0x60] sm:$0x1] 0.0
      %454 = vst [vmem:[#allocation2 + $0x70] sm:$0x1] 0.0
      %455 = vst [vmem:[#allocation2 + $0x80] sm:$0x1] 0.0
      %456 = vst [vmem:[#allocation2 + $0x90] sm:$0x1] 0.0
      %457 = vst [vmem:[#allocation2 + $0x9] sm:$0x1] 0.0
      %458 = vst [vmem:[#allocation2 + $0x19] sm:$0x1] 0.0
      %459 = vst [vmem:[#allocation2 + $0x29] sm:$0x1] 0.0
      %460 = vst [vmem:[#allocation2 + $0x39] sm:$0x1] 0.0
      %461 = vst [vmem:[#allocation2 + $0x49] sm:$0x1] 0.0
      %462 = vst [vmem:[#allocation2 + $0x59] sm:$0x1] 0.0
      %463 = vst [vmem:[#allocation2 + $0x69] sm:$0x1] 0.0
      %464 = vst [vmem:[#allocation2 + $0x79] sm:$0x1] 0.0
      %465 = vst [vmem:[#allocation2 + $0x89] sm:$0x1] 0.0
      %466 = vst [vmem:[#allocation2 + $0x99] sm:$0x1] 0.0
      %s467 = scalar_lea.vmem [#allocation2], 16
      %468 = vst [vmem:[%s467 + $0x1] sm:$0xff] %v434
      %469 = vst [vmem:[%s467 + $0x11] sm:$0xff] %v435
      %470 = vst [vmem:[%s467 + $0x21] sm:$0xff] %v436
      %471 = vst [vmem:[%s467 + $0x31] sm:$0xff] %v437
      %472 = vst [vmem:[%s467 + $0x41] sm:$0xff] %v438
      %473 = vst [vmem:[%s467 + $0x51] sm:$0xff] %v439
      %474 = vst [vmem:[%s467 + $0x61] sm:$0xff] %v440
      %475 = vst [vmem:[%s467 + $0x71] sm:$0xff] %v441
      %v476 = vld [vmem:[#allocation2] ss:$2 sm:$0xf]
      %s477 = scalar_lea.vmem [#allocation2], 16
      %v478 = vld [vmem:[%s477] ss:$2 sm:$0xf]
      %s479 = scalar_lea.vmem [#allocation2], 32
      %v480 = vld [vmem:[%s479] ss:$2 sm:$0xf]
      %s481 = scalar_lea.vmem [#allocation2], 48
      %v482 = vld [vmem:[%s481] ss:$2 sm:$0xf]
      %s483 = scalar_lea.vmem [#allocation2], 64
      %v484 = vld [vmem:[%s483] ss:$2 sm:$0xf]
      %s485 = scalar_lea.vmem [#allocation2], 80
      %v486 = vld [vmem:[%s485] ss:$2 sm:$0xf]
      %s487 = scalar_lea.vmem [#allocation2], 96
      %v488 = vld [vmem:[%s487] ss:$2 sm:$0xf]
      %s489 = scalar_lea.vmem [#allocation2], 112
      %v490 = vld [vmem:[%s489] ss:$2 sm:$0xf]
      %s491 = scalar_lea.vmem [#allocation2], 128
      %v492 = vld [vmem:[%s491] ss:$2 sm:$0xf]
      %s493 = scalar_lea.vmem [#allocation2], 1
      %v494 = vld [vmem:[%s493] ss:$2 sm:$0xf]
      %s495 = scalar_lea.vmem [#allocation2], 17
      %v496 = vld [vmem:[%s495] ss:$2 sm:$0xf]
      %s497 = scalar_lea.vmem [#allocation2], 33
      %v498 = vld [vmem:[%s497] ss:$2 sm:$0xf]
      %s499 = scalar_lea.vmem [#allocation2], 49
      %v500 = vld [vmem:[%s499] ss:$2 sm:$0xf]
      %s501 = scalar_lea.vmem [#allocation2], 65
      %v502 = vld [vmem:[%s501] ss:$2 sm:$0xf]
      %s503 = scalar_lea.vmem [#allocation2], 81
      %v504 = vld [vmem:[%s503] ss:$2 sm:$0xf]
      %s505 = scalar_lea.vmem [#allocation2], 97
      %v506 = vld [vmem:[%s505] ss:$2 sm:$0xf]
      %s507 = scalar_lea.vmem [#allocation2], 113
      %v508 = vld [vmem:[%s507] ss:$2 sm:$0xf]
      %s509 = scalar_lea.vmem [#allocation2], 129
      %v510 = vld [vmem:[%s509] ss:$2 sm:$0xf]
      %v511 = vmax.f32 %v476, %v494
      %v512 = vmax.f32 %v478, %v496
      %v513 = vmax.f32 %v480, %v498
      %v514 = vmax.f32 %v482, %v500
      %v515 = vmax.f32 %v484, %v502
      %v516 = vmax.f32 %v486, %v504
      %v517 = vmax.f32 %v488, %v506
      %v518 = vmax.f32 %v490, %v508
      %v519 = vmax.f32 %v492, %v510
      %s520 = scalar_lea.vmem [#allocation2], 2
      %v521 = vld [vmem:[%s520] ss:$2 sm:$0xf]
      %s522 = scalar_lea.vmem [#allocation2], 18
      %v523 = vld [vmem:[%s522] ss:$2 sm:$0xf]
      %s524 = scalar_lea.vmem [#allocation2], 34
      %v525 = vld [vmem:[%s524] ss:$2 sm:$0xf]
      %s526 = scalar_lea.vmem [#allocation2], 50
      %v527 = vld [vmem:[%s526] ss:$2 sm:$0xf]
      %s528 = scalar_lea.vmem [#allocation2], 66
      %v529 = vld [vmem:[%s528] ss:$2 sm:$0xf]
      %s530 = scalar_lea.vmem [#allocation2], 82
      %v531 = vld [vmem:[%s530] ss:$2 sm:$0xf]
      %s532 = scalar_lea.vmem [#allocation2], 98
      %v533 = vld [vmem:[%s532] ss:$2 sm:$0xf]
      %s534 = scalar_lea.vmem [#allocation2], 114
      %v535 = vld [vmem:[%s534] ss:$2 sm:$0xf]
      %s536 = scalar_lea.vmem [#allocation2], 130
      %v537 = vld [vmem:[%s536] ss:$2 sm:$0xf]
      %v538 = vmax.f32 %v511, %v521
      %v539 = vmax.f32 %v512, %v523
      %v540 = vmax.f32 %v513, %v525
      %v541 = vmax.f32 %v514, %v527
      %v542 = vmax.f32 %v515, %v529
      %v543 = vmax.f32 %v516, %v531
      %v544 = vmax.f32 %v517, %v533
      %v545 = vmax.f32 %v518, %v535
      %v546 = vmax.f32 %v519, %v537
      %v547 = vmax.f32 %v538, %v539
      %v548 = vmax.f32 %v540, %v541
      %v549 = vmax.f32 %v542, %v543
      %v550 = vmax.f32 %v544, %v545
      %v551 = vmax.f32 %v547, %v540
      %v552 = vmax.f32 %v548, %v542
      %v553 = vmax.f32 %v549, %v544
      %v554 = vmax.f32 %v550, %v546
      %v555 = vpack.c.bf16 %v551, %v551
      %v556 = vpack.c.bf16 %v552, %v552
      %v557 = vpack.c.bf16 %v553, %v553
      %v558 = vpack.c.bf16 %v554, %v554
      %559 = vst [vmem:[%s197] sm:$0x3] %v555
      %560 = vst [vmem:[%s197 + $0x2] sm:$0x3] %v556
      %561 = vst [vmem:[%s197 + $0x4] sm:$0x3] %v557
      %562 = vst [vmem:[%s197 + $0x6] sm:$0x3] %v558
      %p563 = scmp.lt.s32.totalorder %s15, 7
      %s564 = scalar_select %p563, %s15, 7
      %s565 = smul.addr %s564, 4
      %s566 = smul.addr %s565, 2
      %s567 = scalar_lea.vmem %s4, %s566
      // Predicated region
      $region37: #{resnet_basic_stem.3} parent=35 // pred_check
        %p568 = pneg %p122
      $region38: #{resnet_basic_stem.3} parent=35 // pred_check_branch
        %570 = sbr.rel (%p568) target = $region40
      $region39: #{resnet_basic_stem.3} parent=35 // pred_region
        _
      $region40: #{resnet_basic_stem.3} parent=35 // pred_fallthru
        _
    $region36: #{resnet_basic_stem.3} parent=5 // pred_fallthru
      _
    %p571 = scmp.le.s32.totalorder 2, %s10
    // Predicated region
    $region41: #{resnet_basic_stem.3} parent=5 // pred_check
      %p572 = pneg %p571
    $region42: #{resnet_basic_stem.3} parent=5 // pred_check_branch
      %574 = sbr.rel (%p572) target = $region44
    $region43: #{resnet_basic_stem.3} parent=5 // pred_region
      %s575 = ssub.s32 %s10, 2
      // Predicated region
      $region45: #{resnet_basic_stem.3} parent=43 // pred_check
        %p576 = pneg %p128
      $region46: #{resnet_basic_stem.3} parent=43 // pred_check_branch
        %578 = sbr.rel (%p576) target = $region48
      $region47: #{resnet_basic_stem.3} parent=43 // pred_region
        %p579 = scmp.lt.s32.totalorder %s16, 7
        %s580 = scalar_select %p579, %s16, 7
        %s581 = smul.addr %s580, 4
        %s582 = smul.addr %s581, 2
        %s583 = scalar_lea.vmem %s4, %s582
      $region48: #{resnet_basic_stem.3} parent=43 // pred_fallthru
        _
    $region44: #{resnet_basic_stem.3} parent=5 // pred_fallthru
      _
  $region6: #{resnet_basic_stem.3} parent=0 // loop_footer
    %s14 = sadd.s32 1, %s10
  $region7: #{resnet_basic_stem.3} parent=0 // loop_footer_branch
    %9 = sbr.rel target = $region3
  $region8: #{resnet_basic_stem.3} parent=0 // loop_exit
    _

</llo_original>
